<compile_context>
chip_gen: v7x
topology: tpu7x:2x2x1
jax: 0.10.0
libtpu: 0.0.40
codegen_flags: <defaults>
</compile_context>

<pallas_src>
from functools import partial

import jax
import jax.numpy as jnp
from jax import lax
from jax.experimental import pallas as pl
from jax.experimental.pallas import tpu as pltpu  # noqa: F401


def _elu(x):
    # exp only evaluated on the non-positive branch (keeps the unselected
    # branch finite, safe if a backward pass is ever added).
    return jnp.where(x > 0, x, jnp.exp(jnp.minimum(x, 0.0)) - 1.0)


# ---------------------------------------------------------------------------
# Fused kernel: entire TwoProcessedGAT forward in one pallas_call
# ---------------------------------------------------------------------------
def _fused_gat_kernel(x_ref, adj_ref, *rest, layer_specs, negative_slope):
    """rest = (w_aug_0, wa_t_0, ..., w_aug_{L-1}, wa_t_{L-1}, w_out, out).

    w_aug_l : (Fin_l, H_l*D_l + H_l)  == [ W_l | W_l @ blockdiag(ar_l) ]
              (layer 0 additionally has w_in folded in)
    wa_t_l  : (H_l, Fin_l)            == (W_l @ blockdiag(al_l)).T
              (layer 0 folded with w_in as well)
    """
    num_gat = len(layer_specs)
    w_aug_refs = rest[0:2 * num_gat:2]
    wa_t_refs = rest[1:2 * num_gat:2]
    w_out_ref = rest[2 * num_gat]
    o_ref = rest[2 * num_gat + 1]

    adj = adj_ref[...].astype(jnp.float32)          # (N, N) dst x src, 0/1 mask
    h = x_ref[...].astype(jnp.float32)              # (N, Fin)

    for l, (num_heads, out_dim) in enumerate(layer_specs):
        hd = num_heads * out_dim
        w_aug = w_aug_refs[l][...].astype(jnp.float32)   # (Fin, H*D + H)
        wa_t = wa_t_refs[l][...].astype(jnp.float32)     # (H, Fin)

        # One matmul -> per-head transformed features AND per-head dst scores.
        wh_aug = jnp.dot(h, w_aug, preferred_element_type=jnp.float32)
        wh = wh_aug[:, :hd]                              # (N, H*D)
        er = wh_aug[:, hd:hd + num_heads]                # (N, H) dst scores
        # Source scores for all heads, already laid out (H, N) along lanes.
        el_t = lax.dot_general(wa_t, h, (((1,), (1,)), ((), ())),
                               preferred_element_type=jnp.float32)  # (H, N)

        is_last = (l == num_gat - 1)
        head_outs = []
        acc = None
        for hh in range(num_heads):                      # tiny static unroll
            # e[i, j] = leaky_relu(ar.Wh_i + al.Wh_j), i = dst, j = src
            e = er[:, hh:hh + 1] + el_t[hh:hh + 1, :]    # (N, N)
            e = jnp.where(e > 0, e, negative_slope * e)  # LeakyReLU
            # masked softmax over incoming edges; unmasked max keeps exp <= 1
            m = jnp.max(e, axis=-1, keepdims=True)
            p = jnp.exp(e - m) * adj
            alpha = p / jnp.sum(p, axis=-1, keepdims=True)
            out_h = jnp.dot(alpha, wh[:, hh * out_dim:(hh + 1) * out_dim],
                            preferred_element_type=jnp.float32)
            if is_last:
                acc = out_h if acc is None else acc + out_h
            else:
                head_outs.append(_elu(out_h))            # hidden layers: ELU
        if is_last:
            h = acc * (1.0 / num_heads)                  # mean over heads
        else:                                            # flatten(1): concat
            h = (jnp.concatenate(head_outs, axis=-1)
                 if num_heads > 1 else head_outs[0])

    # final activation + out_process (Linear, no bias) -> single dense store
    h = _elu(h)
    o_ref[...] = jnp.dot(h, w_out_ref[...].astype(jnp.float32),
                         preferred_element_type=jnp.float32)


# ---------------------------------------------------------------------------
# Host-side parameter preparation (pure algebra, done once)
# ---------------------------------------------------------------------------
def prepare_fused_params(params):
    """Fold attention vectors (and w_in for layer 0) into augmented weights."""
    fused = []
    for l, p in enumerate(params["gat"]):
        num_heads, out_dim = p["heads"], p["out_dim"]
        w = p["w"].astype(jnp.float32)                       # (Fin, H*D)
        w3 = w.reshape(w.shape[0], num_heads, out_dim)
        wr = jnp.einsum("fhd,hd->fh", w3, p["ar"])           # dst-score weights
        wa = jnp.einsum("fhd,hd->fh", w3, p["al"])           # src-score weights
        w_aug = jnp.concatenate([w, wr], axis=-1)            # (Fin, H*D + H)
        if l == 0:                                           # fold in_process
            w_aug = params["w_in"] @ w_aug
            wa = params["w_in"] @ wa
        fused.append((w_aug, jnp.transpose(wa)))             # wa_t: (H, Fin)
    return fused


def two_processed_gat_forward(adj, x, params, *, negative_slope=0.2):
    fused = prepare_fused_params(params)
    layer_specs = tuple((p["heads"], p["out_dim"]) for p in params["gat"])
    n = x.shape[0]
    num_classes = params["w_out"].shape[1]

    inputs = [x, adj]
    for w_aug, wa_t in fused:
        inputs += [w_aug, wa_t]
    inputs.append(params["w_out"])

    kern = partial(_fused_gat_kernel, layer_specs=layer_specs,
                   negative_slope=negative_slope)
    return pl.pallas_call(
        kern,
        out_shape=jax.ShapeDtypeStruct((n, num_classes), jnp.float32),
        grid=(1,),
        in_specs=[pl.BlockSpec(a.shape, lambda i: (0, 0)) for a in inputs],
        out_specs=pl.BlockSpec((n, num_classes), lambda i: (0, 0)),
    )(*inputs)


# ---------------------------------------------------------------------------
# Parameter init + pure-JAX reference (for correctness check)
# ---------------------------------------------------------------------------
def init_params(key, *, num_layers, in_dim, num_hidden, num_classes, heads,
                reduced_dim):
    def nrm(k, shape, scale=0.1):
        return (scale * jax.random.normal(k, shape)).astype(jnp.float32)

    keys = iter(jax.random.split(key, 64))
    params = {"w_in": nrm(next(keys), (in_dim, reduced_dim)),
              "w_out": nrm(next(keys), (num_hidden, num_classes)),
              "gat": []}
    in_feats = reduced_dim
    for l in range(num_layers):
        h = heads[l]
        params["gat"].append({
            "w": nrm(next(keys), (in_feats, h * num_hidden)),
            "al": nrm(next(keys), (h, num_hidden)),
            "ar": nrm(next(keys), (h, num_hidden)),
            "heads": h, "out_dim": num_hidden,
        })
        in_feats = num_hidden * h
    h = heads[-1]
    params["gat"].append({                                   # output GAT layer
        "w": nrm(next(keys), (in_feats, h * num_hidden)),
        "al": nrm(next(keys), (h, num_hidden)),
        "ar": nrm(next(keys), (h, num_hidden)),
        "heads": h, "out_dim": num_hidden,
    })
    return params


def reference_forward(adj, x, params, *, negative_slope=0.2):
    """Plain-JAX reference of the same forward (for numerical validation)."""
    h = x @ params["w_in"]
    num_gat = len(params["gat"])
    for l, p in enumerate(params["gat"]):
        H, D = p["heads"], p["out_dim"]
        wh = (h @ p["w"]).reshape(-1, H, D)                  # (N, H, D)
        el = jnp.einsum("nhd,hd->nh", wh, p["al"])           # src scores
        er = jnp.einsum("nhd,hd->nh", wh, p["ar"])           # dst scores
        e = er[:, None, :] + el[None, :, :]                  # (dst, src, H)
        e = jnp.where(e > 0, e, negative_slope * e)
        e = jnp.where(adj[:, :, None] > 0, e, -jnp.inf)
        alpha = jax.nn.softmax(e, axis=1)                    # over src
        out = jnp.einsum("ijh,jhd->ihd", alpha, wh)          # (N, H, D)
        if l < num_gat - 1:
            h = _elu(out).reshape(out.shape[0], H * D)
        else:
            h = out.mean(axis=1)
    h = _elu(h)
    return h @ params["w_out"]


# ---------------------------------------------------------------------------
if __name__ == "__main__":
    NUM_LAYERS = 2
    IN_DIM = 32
    NUM_HIDDEN = 8
    NUM_CLASSES = 4
    HEADS = [2, 2, 1]        # len = num_layers + 1
    REDUCED_DIM = 16
    N_NODES = 16

    key = jax.random.PRNGKey(0)
    k_x, k_adj, k_par = jax.random.split(key, 3)

    x = jax.random.normal(k_x, (N_NODES, IN_DIM), dtype=jnp.float32)

    # Random symmetric adjacency with self-loops (dense 0/1 float mask)
    a = jax.random.bernoulli(k_adj, 0.3, (N_NODES, N_NODES))
    adj = jnp.clip(a.astype(jnp.float32) + a.T.astype(jnp.float32)
                   + jnp.eye(N_NODES, dtype=jnp.float32), 0.0, 1.0)

    params = init_params(k_par, num_layers=NUM_LAYERS, in_dim=IN_DIM,
                         num_hidden=NUM_HIDDEN, num_classes=NUM_CLASSES,
                         heads=HEADS, reduced_dim=REDUCED_DIM)

    out = two_processed_gat_forward(adj, x, params)
    out = jax.block_until_ready(out)
    assert out.shape == (N_NODES, NUM_CLASSES), out.shape
    assert bool(jnp.all(jnp.isfinite(out)))

    ref = reference_forward(adj, x, params)
    max_err = float(jnp.max(jnp.abs(out - ref)))
    assert max_err < 1e-3, f"mismatch vs JAX reference: {max_err}"

    print("KERNEL_OK")
</pallas_src>

<mosaic_0001>
module attributes {stable_mosaic.version = 11 : i64} {
  func.func @_fused_gat_kernel(%arg0: i32, %arg1: memref<16x32xf32, #tpu.memory_space<vmem>>, %arg2: memref<16x16xf32, #tpu.memory_space<vmem>>, %arg3: memref<32x18xf32, #tpu.memory_space<vmem>>, %arg4: memref<2x32xf32, #tpu.memory_space<vmem>>, %arg5: memref<16x18xf32, #tpu.memory_space<vmem>>, %arg6: memref<2x16xf32, #tpu.memory_space<vmem>>, %arg7: memref<16x9xf32, #tpu.memory_space<vmem>>, %arg8: memref<1x16xf32, #tpu.memory_space<vmem>>, %arg9: memref<8x4xf32, #tpu.memory_space<vmem>>, %arg10: memref<16x4xf32, #tpu.memory_space<vmem>>) attributes {dimension_semantics = [#tpu.dimension_semantics<arbitrary>], iteration_bounds = array<i64: 1>, scalar_prefetch = 0 : i64, scratch_operands = 0 : i64, tpu.core_type = #tpu.core_type<tc>, window_params = [{pipeline_mode = #tpu.pipeline_mode<synchronous>, transform_indices = @transform_0, window_bounds = array<i64: 16, 32>}, {pipeline_mode = #tpu.pipeline_mode<synchronous>, transform_indices = @transform_1, window_bounds = array<i64: 16, 16>}, {pipeline_mode = #tpu.pipeline_mode<synchronous>, transform_indices = @transform_2, window_bounds = array<i64: 32, 18>}, {pipeline_mode = #tpu.pipeline_mode<synchronous>, transform_indices = @transform_3, window_bounds = array<i64: 2, 32>}, {pipeline_mode = #tpu.pipeline_mode<synchronous>, transform_indices = @transform_4, window_bounds = array<i64: 16, 18>}, {pipeline_mode = #tpu.pipeline_mode<synchronous>, transform_indices = @transform_5, window_bounds = array<i64: 2, 16>}, {pipeline_mode = #tpu.pipeline_mode<synchronous>, transform_indices = @transform_6, window_bounds = array<i64: 16, 9>}, {pipeline_mode = #tpu.pipeline_mode<synchronous>, transform_indices = @transform_7, window_bounds = array<i64: 1, 16>}, {pipeline_mode = #tpu.pipeline_mode<synchronous>, transform_indices = @transform_8, window_bounds = array<i64: 8, 4>}, {pipeline_mode = #tpu.pipeline_mode<synchronous>, transform_indices = @transform_9, window_bounds = array<i64: 16, 4>}]} {
    %c0 = arith.constant 0 : index
    %c0_0 = arith.constant 0 : index
    %0 = vector.load %arg2[%c0, %c0_0] : memref<16x16xf32, #tpu.memory_space<vmem>>, vector<16x16xf32>
    %c0_1 = arith.constant 0 : index
    %c0_2 = arith.constant 0 : index
    %1 = vector.load %arg1[%c0_1, %c0_2] : memref<16x32xf32, #tpu.memory_space<vmem>>, vector<16x32xf32>
    %c0_3 = arith.constant 0 : index
    %c0_4 = arith.constant 0 : index
    %2 = vector.load %arg3[%c0_3, %c0_4] : memref<32x18xf32, #tpu.memory_space<vmem>>, vector<32x18xf32>
    %c0_5 = arith.constant 0 : index
    %c0_6 = arith.constant 0 : index
    %3 = vector.load %arg4[%c0_5, %c0_6] : memref<2x32xf32, #tpu.memory_space<vmem>>, vector<2x32xf32>
    %cst = arith.constant dense<0.000000e+00> : vector<16x18xf32>
    %4 = tpu.matmul %1, %2, %cst {dimension_numbers = #tpu.dot_dimension_numbers<[1], [0], [0], [1], [0, 0, 1, 1], [], []>} : vector<16x32xf32>, vector<32x18xf32>, vector<16x18xf32> -> vector<16x18xf32>
    %5 = vector.extract_strided_slice %4 {offsets = [0, 0], sizes = [16, 16], strides = [1, 1]} : vector<16x18xf32> to vector<16x16xf32>
    %6 = vector.extract_strided_slice %4 {offsets = [0, 16], sizes = [16, 2], strides = [1, 1]} : vector<16x18xf32> to vector<16x2xf32>
    %cst_7 = arith.constant dense<0.000000e+00> : vector<2x16xf32>
    %7 = tpu.matmul %3, %1, %cst_7 {dimension_numbers = #tpu.dot_dimension_numbers<[1], [1], [0], [0], [0, 0, 1, 0], [], []>} : vector<2x32xf32>, vector<16x32xf32>, vector<2x16xf32> -> vector<2x16xf32>
    %8 = vector.extract_strided_slice %6 {offsets = [0, 0], sizes = [16, 1], strides = [1, 1]} : vector<16x2xf32> to vector<16x1xf32>
    %9 = vector.extract_strided_slice %7 {offsets = [0, 0], sizes = [1, 16], strides = [1, 1]} : vector<2x16xf32> to vector<1x16xf32>
    %10 = vector.broadcast %8 : vector<16x1xf32> to vector<16x16xf32>
    %11 = vector.broadcast %9 : vector<1x16xf32> to vector<16x16xf32>
    %12 = arith.addf %10, %11 : vector<16x16xf32>
    %cst_8 = arith.constant 0.000000e+00 : f32
    %13 = vector.broadcast %cst_8 : f32 to vector<16x16xf32>
    %14 = arith.cmpf ogt, %12, %13 : vector<16x16xf32>
    %cst_9 = arith.constant 2.000000e-01 : f32
    %15 = vector.broadcast %cst_9 : f32 to vector<16x16xf32>
    %16 = arith.mulf %15, %12 : vector<16x16xf32>
    %17 = arith.select %14, %12, %16 : vector<16x16xi1>, vector<16x16xf32>
    %cst_10 = arith.constant dense<0xFF800000> : vector<16xf32>
    %18 = vector.multi_reduction <maximumf>, %17, %cst_10 [1] : vector<16x16xf32> to vector<16xf32>
    %19 = vector.shape_cast %18 : vector<16xf32> to vector<16x1xf32>
    %20 = vector.broadcast %19 : vector<16x1xf32> to vector<16x16xf32>
    %21 = arith.subf %17, %20 : vector<16x16xf32>
    %22 = math.exp %21 : vector<16x16xf32>
    %23 = arith.mulf %22, %0 : vector<16x16xf32>
    %cst_11 = arith.constant dense<0.000000e+00> : vector<16xf32>
    %24 = vector.multi_reduction <add>, %23, %cst_11 [1] : vector<16x16xf32> to vector<16xf32>
    %25 = vector.shape_cast %24 : vector<16xf32> to vector<16x1xf32>
    %26 = vector.broadcast %25 : vector<16x1xf32> to vector<16x16xf32>
    %27 = arith.divf %23, %26 : vector<16x16xf32>
    %28 = vector.extract_strided_slice %5 {offsets = [0, 0], sizes = [16, 8], strides = [1, 1]} : vector<16x16xf32> to vector<16x8xf32>
    %cst_12 = arith.constant dense<0.000000e+00> : vector<16x8xf32>
    %29 = tpu.matmul %27, %28, %cst_12 {dimension_numbers = #tpu.dot_dimension_numbers<[1], [0], [0], [1], [0, 0, 1, 1], [], []>} : vector<16x16xf32>, vector<16x8xf32>, vector<16x8xf32> -> vector<16x8xf32>
    %cst_13 = arith.constant 0.000000e+00 : f32
    %30 = vector.broadcast %cst_13 : f32 to vector<16x8xf32>
    %31 = arith.cmpf ogt, %29, %30 : vector<16x8xf32>
    %cst_14 = arith.constant 0.000000e+00 : f32
    %32 = vector.broadcast %cst_14 : f32 to vector<16x8xf32>
    %33 = arith.minimumf %29, %32 : vector<16x8xf32>
    %34 = math.exp %33 : vector<16x8xf32>
    %cst_15 = arith.constant 1.000000e+00 : f32
    %35 = vector.broadcast %cst_15 : f32 to vector<16x8xf32>
    %36 = arith.subf %34, %35 : vector<16x8xf32>
    %37 = arith.select %31, %29, %36 : vector<16x8xi1>, vector<16x8xf32>
    %38 = vector.extract_strided_slice %6 {offsets = [0, 1], sizes = [16, 1], strides = [1, 1]} : vector<16x2xf32> to vector<16x1xf32>
    %39 = vector.extract_strided_slice %7 {offsets = [1, 0], sizes = [1, 16], strides = [1, 1]} : vector<2x16xf32> to vector<1x16xf32>
    %40 = vector.broadcast %38 : vector<16x1xf32> to vector<16x16xf32>
    %41 = vector.broadcast %39 : vector<1x16xf32> to vector<16x16xf32>
    %42 = arith.addf %40, %41 : vector<16x16xf32>
    %cst_16 = arith.constant 0.000000e+00 : f32
    %43 = vector.broadcast %cst_16 : f32 to vector<16x16xf32>
    %44 = arith.cmpf ogt, %42, %43 : vector<16x16xf32>
    %cst_17 = arith.constant 2.000000e-01 : f32
    %45 = vector.broadcast %cst_17 : f32 to vector<16x16xf32>
    %46 = arith.mulf %45, %42 : vector<16x16xf32>
    %47 = arith.select %44, %42, %46 : vector<16x16xi1>, vector<16x16xf32>
    %cst_18 = arith.constant dense<0xFF800000> : vector<16xf32>
    %48 = vector.multi_reduction <maximumf>, %47, %cst_18 [1] : vector<16x16xf32> to vector<16xf32>
    %49 = vector.shape_cast %48 : vector<16xf32> to vector<16x1xf32>
    %50 = vector.broadcast %49 : vector<16x1xf32> to vector<16x16xf32>
    %51 = arith.subf %47, %50 : vector<16x16xf32>
    %52 = math.exp %51 : vector<16x16xf32>
    %53 = arith.mulf %52, %0 : vector<16x16xf32>
    %cst_19 = arith.constant dense<0.000000e+00> : vector<16xf32>
    %54 = vector.multi_reduction <add>, %53, %cst_19 [1] : vector<16x16xf32> to vector<16xf32>
    %55 = vector.shape_cast %54 : vector<16xf32> to vector<16x1xf32>
    %56 = vector.broadcast %55 : vector<16x1xf32> to vector<16x16xf32>
    %57 = arith.divf %53, %56 : vector<16x16xf32>
    %58 = vector.extract_strided_slice %5 {offsets = [0, 8], sizes = [16, 8], strides = [1, 1]} : vector<16x16xf32> to vector<16x8xf32>
    %cst_20 = arith.constant dense<0.000000e+00> : vector<16x8xf32>
    %59 = tpu.matmul %57, %58, %cst_20 {dimension_numbers = #tpu.dot_dimension_numbers<[1], [0], [0], [1], [0, 0, 1, 1], [], []>} : vector<16x16xf32>, vector<16x8xf32>, vector<16x8xf32> -> vector<16x8xf32>
    %cst_21 = arith.constant 0.000000e+00 : f32
    %60 = vector.broadcast %cst_21 : f32 to vector<16x8xf32>
    %61 = arith.cmpf ogt, %59, %60 : vector<16x8xf32>
    %cst_22 = arith.constant 0.000000e+00 : f32
    %62 = vector.broadcast %cst_22 : f32 to vector<16x8xf32>
    %63 = arith.minimumf %59, %62 : vector<16x8xf32>
    %64 = math.exp %63 : vector<16x8xf32>
    %cst_23 = arith.constant 1.000000e+00 : f32
    %65 = vector.broadcast %cst_23 : f32 to vector<16x8xf32>
    %66 = arith.subf %64, %65 : vector<16x8xf32>
    %67 = arith.select %61, %59, %66 : vector<16x8xi1>, vector<16x8xf32>
    %68 = tpu.concatenate %37, %67 in 1 : vector<16x8xf32>, vector<16x8xf32> -> vector<16x16xf32>
    %c0_24 = arith.constant 0 : index
    %c0_25 = arith.constant 0 : index
    %69 = vector.load %arg5[%c0_24, %c0_25] : memref<16x18xf32, #tpu.memory_space<vmem>>, vector<16x18xf32>
    %c0_26 = arith.constant 0 : index
    %c0_27 = arith.constant 0 : index
    %70 = vector.load %arg6[%c0_26, %c0_27] : memref<2x16xf32, #tpu.memory_space<vmem>>, vector<2x16xf32>
    %cst_28 = arith.constant dense<0.000000e+00> : vector<16x18xf32>
    %71 = tpu.matmul %68, %69, %cst_28 {dimension_numbers = #tpu.dot_dimension_numbers<[1], [0], [0], [1], [0, 0, 1, 1], [], []>} : vector<16x16xf32>, vector<16x18xf32>, vector<16x18xf32> -> vector<16x18xf32>
    %72 = vector.extract_strided_slice %71 {offsets = [0, 0], sizes = [16, 16], strides = [1, 1]} : vector<16x18xf32> to vector<16x16xf32>
    %73 = vector.extract_strided_slice %71 {offsets = [0, 16], sizes = [16, 2], strides = [1, 1]} : vector<16x18xf32> to vector<16x2xf32>
    %cst_29 = arith.constant dense<0.000000e+00> : vector<2x16xf32>
    %74 = tpu.matmul %70, %68, %cst_29 {dimension_numbers = #tpu.dot_dimension_numbers<[1], [1], [0], [0], [0, 0, 1, 0], [], []>} : vector<2x16xf32>, vector<16x16xf32>, vector<2x16xf32> -> vector<2x16xf32>
    %75 = vector.extract_strided_slice %73 {offsets = [0, 0], sizes = [16, 1], strides = [1, 1]} : vector<16x2xf32> to vector<16x1xf32>
    %76 = vector.extract_strided_slice %74 {offsets = [0, 0], sizes = [1, 16], strides = [1, 1]} : vector<2x16xf32> to vector<1x16xf32>
    %77 = vector.broadcast %75 : vector<16x1xf32> to vector<16x16xf32>
    %78 = vector.broadcast %76 : vector<1x16xf32> to vector<16x16xf32>
    %79 = arith.addf %77, %78 : vector<16x16xf32>
    %cst_30 = arith.constant 0.000000e+00 : f32
    %80 = vector.broadcast %cst_30 : f32 to vector<16x16xf32>
    %81 = arith.cmpf ogt, %79, %80 : vector<16x16xf32>
    %cst_31 = arith.constant 2.000000e-01 : f32
    %82 = vector.broadcast %cst_31 : f32 to vector<16x16xf32>
    %83 = arith.mulf %82, %79 : vector<16x16xf32>
    %84 = arith.select %81, %79, %83 : vector<16x16xi1>, vector<16x16xf32>
    %cst_32 = arith.constant dense<0xFF800000> : vector<16xf32>
    %85 = vector.multi_reduction <maximumf>, %84, %cst_32 [1] : vector<16x16xf32> to vector<16xf32>
    %86 = vector.shape_cast %85 : vector<16xf32> to vector<16x1xf32>
    %87 = vector.broadcast %86 : vector<16x1xf32> to vector<16x16xf32>
    %88 = arith.subf %84, %87 : vector<16x16xf32>
    %89 = math.exp %88 : vector<16x16xf32>
    %90 = arith.mulf %89, %0 : vector<16x16xf32>
    %cst_33 = arith.constant dense<0.000000e+00> : vector<16xf32>
    %91 = vector.multi_reduction <add>, %90, %cst_33 [1] : vector<16x16xf32> to vector<16xf32>
    %92 = vector.shape_cast %91 : vector<16xf32> to vector<16x1xf32>
    %93 = vector.broadcast %92 : vector<16x1xf32> to vector<16x16xf32>
    %94 = arith.divf %90, %93 : vector<16x16xf32>
    %95 = vector.extract_strided_slice %72 {offsets = [0, 0], sizes = [16, 8], strides = [1, 1]} : vector<16x16xf32> to vector<16x8xf32>
    %cst_34 = arith.constant dense<0.000000e+00> : vector<16x8xf32>
    %96 = tpu.matmul %94, %95, %cst_34 {dimension_numbers = #tpu.dot_dimension_numbers<[1], [0], [0], [1], [0, 0, 1, 1], [], []>} : vector<16x16xf32>, vector<16x8xf32>, vector<16x8xf32> -> vector<16x8xf32>
    %cst_35 = arith.constant 0.000000e+00 : f32
    %97 = vector.broadcast %cst_35 : f32 to vector<16x8xf32>
    %98 = arith.cmpf ogt, %96, %97 : vector<16x8xf32>
    %cst_36 = arith.constant 0.000000e+00 : f32
    %99 = vector.broadcast %cst_36 : f32 to vector<16x8xf32>
    %100 = arith.minimumf %96, %99 : vector<16x8xf32>
    %101 = math.exp %100 : vector<16x8xf32>
    %cst_37 = arith.constant 1.000000e+00 : f32
    %102 = vector.broadcast %cst_37 : f32 to vector<16x8xf32>
    %103 = arith.subf %101, %102 : vector<16x8xf32>
    %104 = arith.select %98, %96, %103 : vector<16x8xi1>, vector<16x8xf32>
    %105 = vector.extract_strided_slice %73 {offsets = [0, 1], sizes = [16, 1], strides = [1, 1]} : vector<16x2xf32> to vector<16x1xf32>
    %106 = vector.extract_strided_slice %74 {offsets = [1, 0], sizes = [1, 16], strides = [1, 1]} : vector<2x16xf32> to vector<1x16xf32>
    %107 = vector.broadcast %105 : vector<16x1xf32> to vector<16x16xf32>
    %108 = vector.broadcast %106 : vector<1x16xf32> to vector<16x16xf32>
    %109 = arith.addf %107, %108 : vector<16x16xf32>
    %cst_38 = arith.constant 0.000000e+00 : f32
    %110 = vector.broadcast %cst_38 : f32 to vector<16x16xf32>
    %111 = arith.cmpf ogt, %109, %110 : vector<16x16xf32>
    %cst_39 = arith.constant 2.000000e-01 : f32
    %112 = vector.broadcast %cst_39 : f32 to vector<16x16xf32>
    %113 = arith.mulf %112, %109 : vector<16x16xf32>
    %114 = arith.select %111, %109, %113 : vector<16x16xi1>, vector<16x16xf32>
    %cst_40 = arith.constant dense<0xFF800000> : vector<16xf32>
    %115 = vector.multi_reduction <maximumf>, %114, %cst_40 [1] : vector<16x16xf32> to vector<16xf32>
    %116 = vector.shape_cast %115 : vector<16xf32> to vector<16x1xf32>
    %117 = vector.broadcast %116 : vector<16x1xf32> to vector<16x16xf32>
    %118 = arith.subf %114, %117 : vector<16x16xf32>
    %119 = math.exp %118 : vector<16x16xf32>
    %120 = arith.mulf %119, %0 : vector<16x16xf32>
    %cst_41 = arith.constant dense<0.000000e+00> : vector<16xf32>
    %121 = vector.multi_reduction <add>, %120, %cst_41 [1] : vector<16x16xf32> to vector<16xf32>
    %122 = vector.shape_cast %121 : vector<16xf32> to vector<16x1xf32>
    %123 = vector.broadcast %122 : vector<16x1xf32> to vector<16x16xf32>
    %124 = arith.divf %120, %123 : vector<16x16xf32>
    %125 = vector.extract_strided_slice %72 {offsets = [0, 8], sizes = [16, 8], strides = [1, 1]} : vector<16x16xf32> to vector<16x8xf32>
    %cst_42 = arith.constant dense<0.000000e+00> : vector<16x8xf32>
    %126 = tpu.matmul %124, %125, %cst_42 {dimension_numbers = #tpu.dot_dimension_numbers<[1], [0], [0], [1], [0, 0, 1, 1], [], []>} : vector<16x16xf32>, vector<16x8xf32>, vector<16x8xf32> -> vector<16x8xf32>
    %cst_43 = arith.constant 0.000000e+00 : f32
    %127 = vector.broadcast %cst_43 : f32 to vector<16x8xf32>
    %128 = arith.cmpf ogt, %126, %127 : vector<16x8xf32>
    %cst_44 = arith.constant 0.000000e+00 : f32
    %129 = vector.broadcast %cst_44 : f32 to vector<16x8xf32>
    %130 = arith.minimumf %126, %129 : vector<16x8xf32>
    %131 = math.exp %130 : vector<16x8xf32>
    %cst_45 = arith.constant 1.000000e+00 : f32
    %132 = vector.broadcast %cst_45 : f32 to vector<16x8xf32>
    %133 = arith.subf %131, %132 : vector<16x8xf32>
    %134 = arith.select %128, %126, %133 : vector<16x8xi1>, vector<16x8xf32>
    %135 = tpu.concatenate %104, %134 in 1 : vector<16x8xf32>, vector<16x8xf32> -> vector<16x16xf32>
    %c0_46 = arith.constant 0 : index
    %c0_47 = arith.constant 0 : index
    %136 = vector.load %arg7[%c0_46, %c0_47] : memref<16x9xf32, #tpu.memory_space<vmem>>, vector<16x9xf32>
    %c0_48 = arith.constant 0 : index
    %c0_49 = arith.constant 0 : index
    %137 = vector.load %arg8[%c0_48, %c0_49] : memref<1x16xf32, #tpu.memory_space<vmem>>, vector<1x16xf32>
    %cst_50 = arith.constant dense<0.000000e+00> : vector<16x9xf32>
    %138 = tpu.matmul %135, %136, %cst_50 {dimension_numbers = #tpu.dot_dimension_numbers<[1], [0], [0], [1], [0, 0, 1, 1], [], []>} : vector<16x16xf32>, vector<16x9xf32>, vector<16x9xf32> -> vector<16x9xf32>
    %139 = vector.extract_strided_slice %138 {offsets = [0, 0], sizes = [16, 8], strides = [1, 1]} : vector<16x9xf32> to vector<16x8xf32>
    %140 = vector.extract_strided_slice %138 {offsets = [0, 8], sizes = [16, 1], strides = [1, 1]} : vector<16x9xf32> to vector<16x1xf32>
    %cst_51 = arith.constant dense<0.000000e+00> : vector<1x16xf32>
    %141 = tpu.matmul %137, %135, %cst_51 {dimension_numbers = #tpu.dot_dimension_numbers<[1], [1], [0], [0], [0, 0, 1, 0], [], []>} : vector<1x16xf32>, vector<16x16xf32>, vector<1x16xf32> -> vector<1x16xf32>
    %142 = vector.broadcast %140 : vector<16x1xf32> to vector<16x16xf32>
    %143 = vector.broadcast %141 : vector<1x16xf32> to vector<16x16xf32>
    %144 = arith.addf %142, %143 : vector<16x16xf32>
    %cst_52 = arith.constant 0.000000e+00 : f32
    %145 = vector.broadcast %cst_52 : f32 to vector<16x16xf32>
    %146 = arith.cmpf ogt, %144, %145 : vector<16x16xf32>
    %cst_53 = arith.constant 2.000000e-01 : f32
    %147 = vector.broadcast %cst_53 : f32 to vector<16x16xf32>
    %148 = arith.mulf %147, %144 : vector<16x16xf32>
    %149 = arith.select %146, %144, %148 : vector<16x16xi1>, vector<16x16xf32>
    %cst_54 = arith.constant dense<0xFF800000> : vector<16xf32>
    %150 = vector.multi_reduction <maximumf>, %149, %cst_54 [1] : vector<16x16xf32> to vector<16xf32>
    %151 = vector.shape_cast %150 : vector<16xf32> to vector<16x1xf32>
    %152 = vector.broadcast %151 : vector<16x1xf32> to vector<16x16xf32>
    %153 = arith.subf %149, %152 : vector<16x16xf32>
    %154 = math.exp %153 : vector<16x16xf32>
    %155 = arith.mulf %154, %0 : vector<16x16xf32>
    %cst_55 = arith.constant dense<0.000000e+00> : vector<16xf32>
    %156 = vector.multi_reduction <add>, %155, %cst_55 [1] : vector<16x16xf32> to vector<16xf32>
    %157 = vector.shape_cast %156 : vector<16xf32> to vector<16x1xf32>
    %158 = vector.broadcast %157 : vector<16x1xf32> to vector<16x16xf32>
    %159 = arith.divf %155, %158 : vector<16x16xf32>
    %cst_56 = arith.constant dense<0.000000e+00> : vector<16x8xf32>
    %160 = tpu.matmul %159, %139, %cst_56 {dimension_numbers = #tpu.dot_dimension_numbers<[1], [0], [0], [1], [0, 0, 1, 1], [], []>} : vector<16x16xf32>, vector<16x8xf32>, vector<16x8xf32> -> vector<16x8xf32>
    %cst_57 = arith.constant 1.000000e+00 : f32
    %161 = vector.broadcast %cst_57 : f32 to vector<16x8xf32>
    %162 = arith.mulf %160, %161 : vector<16x8xf32>
    %cst_58 = arith.constant 0.000000e+00 : f32
    %163 = vector.broadcast %cst_58 : f32 to vector<16x8xf32>
    %164 = arith.cmpf ogt, %162, %163 : vector<16x8xf32>
    %cst_59 = arith.constant 0.000000e+00 : f32
    %165 = vector.broadcast %cst_59 : f32 to vector<16x8xf32>
    %166 = arith.minimumf %162, %165 : vector<16x8xf32>
    %167 = math.exp %166 : vector<16x8xf32>
    %cst_60 = arith.constant 1.000000e+00 : f32
    %168 = vector.broadcast %cst_60 : f32 to vector<16x8xf32>
    %169 = arith.subf %167, %168 : vector<16x8xf32>
    %170 = arith.select %164, %162, %169 : vector<16x8xi1>, vector<16x8xf32>
    %c0_61 = arith.constant 0 : index
    %c0_62 = arith.constant 0 : index
    %171 = vector.load %arg9[%c0_61, %c0_62] : memref<8x4xf32, #tpu.memory_space<vmem>>, vector<8x4xf32>
    %cst_63 = arith.constant dense<0.000000e+00> : vector<16x4xf32>
    %172 = tpu.matmul %170, %171, %cst_63 {dimension_numbers = #tpu.dot_dimension_numbers<[1], [0], [0], [1], [0, 0, 1, 1], [], []>} : vector<16x8xf32>, vector<8x4xf32>, vector<16x4xf32> -> vector<16x4xf32>
    %c0_64 = arith.constant 0 : index
    %c0_65 = arith.constant 0 : index
    %173 = vector.load %arg10[%c0_64, %c0_65] : memref<16x4xf32, #tpu.memory_space<vmem>>, vector<16x4xf32>
    tpu.vector_store %arg10[%c0_64, %c0_65], %172 {strides = array<i32>} : memref<16x4xf32, #tpu.memory_space<vmem>>, vector<16x4xf32>,
    return
  }
  func.func @transform_0(%arg0: i32) -> (i32, i32) {
    %c0_i32 = arith.constant 0 : i32
    %c0_i32_0 = arith.constant 0 : i32
    %c0_i32_1 = arith.constant 0 : i32
    return %c0_i32, %c0_i32_0 : i32, i32
  }
  func.func @transform_1(%arg0: i32) -> (i32, i32) {
    %c0_i32 = arith.constant 0 : i32
    %c0_i32_0 = arith.constant 0 : i32
    %c0_i32_1 = arith.constant 0 : i32
    return %c0_i32, %c0_i32_0 : i32, i32
  }
  func.func @transform_2(%arg0: i32) -> (i32, i32) {
    %c0_i32 = arith.constant 0 : i32
    %c0_i32_0 = arith.constant 0 : i32
    %c0_i32_1 = arith.constant 0 : i32
    return %c0_i32, %c0_i32_0 : i32, i32
  }
  func.func @transform_3(%arg0: i32) -> (i32, i32) {
    %c0_i32 = arith.constant 0 : i32
    %c0_i32_0 = arith.constant 0 : i32
    %c0_i32_1 = arith.constant 0 : i32
    return %c0_i32, %c0_i32_0 : i32, i32
  }
  func.func @transform_4(%arg0: i32) -> (i32, i32) {
    %c0_i32 = arith.constant 0 : i32
    %c0_i32_0 = arith.constant 0 : i32
    %c0_i32_1 = arith.constant 0 : i32
    return %c0_i32, %c0_i32_0 : i32, i32
  }
  func.func @transform_5(%arg0: i32) -> (i32, i32) {
    %c0_i32 = arith.constant 0 : i32
    %c0_i32_0 = arith.constant 0 : i32
    %c0_i32_1 = arith.constant 0 : i32
    return %c0_i32, %c0_i32_0 : i32, i32
  }
  func.func @transform_6(%arg0: i32) -> (i32, i32) {
    %c0_i32 = arith.constant 0 : i32
    %c0_i32_0 = arith.constant 0 : i32
    %c0_i32_1 = arith.constant 0 : i32
    return %c0_i32, %c0_i32_0 : i32, i32
  }
  func.func @transform_7(%arg0: i32) -> (i32, i32) {
    %c0_i32 = arith.constant 0 : i32
    %c0_i32_0 = arith.constant 0 : i32
    %c0_i32_1 = arith.constant 0 : i32
    return %c0_i32, %c0_i32_0 : i32, i32
  }
  func.func @transform_8(%arg0: i32) -> (i32, i32) {
    %c0_i32 = arith.constant 0 : i32
    %c0_i32_0 = arith.constant 0 : i32
    %c0_i32_1 = arith.constant 0 : i32
    return %c0_i32, %c0_i32_0 : i32, i32
  }
  func.func @transform_9(%arg0: i32) -> (i32, i32) {
    %c0_i32 = arith.constant 0 : i32
    %c0_i32_0 = arith.constant 0 : i32
    %c0_i32_1 = arith.constant 0 : i32
    return %c0_i32, %c0_i32_0 : i32, i32
  }
}

</mosaic_0001>

<llo_original>
// kernel: tpu_custom_call.1
$region0: #{tpu_custom_call.1}
  #allocation0 [shape = 'u32[]', space=smem, size = 0x4, offset = 0x4, fixed_abs, tag = 'smem constant byte address 0x4 - core index']
  #allocation1 [shape = 'u32[144,128]{1,0:T(1,128)}', space=vmem, size = 0x12000, scoped, tag = 'internal scratch']
  %s0 = inlined_call_operand.vmem [shape: f32[16,32], index: 0, kind: input, shape index: {}]
  %s1 = inlined_call_operand.vmem [shape: f32[16,16], index: 1, kind: input, shape index: {}]
  %s2 = inlined_call_operand.vmem [shape: f32[32,18], index: 2, kind: input, shape index: {}]
  %s3 = inlined_call_operand.vmem [shape: f32[2,32], index: 3, kind: input, shape index: {}]
  %s4 = inlined_call_operand.vmem [shape: f32[16,18], index: 4, kind: input, shape index: {}]
  %s5 = inlined_call_operand.vmem [shape: f32[2,16], index: 5, kind: input, shape index: {}]
  %s6 = inlined_call_operand.vmem [shape: f32[16,9], index: 6, kind: input, shape index: {}]
  %s7 = inlined_call_operand.vmem [shape: f32[1,16], index: 7, kind: input, shape index: {}]
  %s8 = inlined_call_operand.vmem [shape: f32[8,4], index: 8, kind: input, shape index: {}]
  %s9 = inlined_call_operand.vmem [shape: f32[16,4], index: 9, kind: output, shape index: {}]
  %s10 = sld [smem:[#allocation0]]
  $region46: #{tpu_custom_call.1} parent=0
    _
  %s12 = ssub.s32 1, %s10
  %s13 = scalar_select 0, %s12, %s10
  // Predicated region
  $region2: #{tpu_custom_call.1} parent=0 // pred_check
    _
  $region3: #{tpu_custom_call.1} parent=0 // pred_check_branch
    %15 = sbr.rel (0) target = $region5
  $region4: #{tpu_custom_call.1} parent=0 // pred_region
    _
  $region5: #{tpu_custom_call.1} parent=0 // pred_fallthru
    _
  // Predicated region
  $region6: #{tpu_custom_call.1} parent=0 // pred_check
    _
  $region7: #{tpu_custom_call.1} parent=0 // pred_check_branch
    %17 = sbr.rel (0) target = $region9
  $region8: #{tpu_custom_call.1} parent=0 // pred_region
    _
  $region9: #{tpu_custom_call.1} parent=0 // pred_fallthru
    _
  // Predicated region
  $region10: #{tpu_custom_call.1} parent=0 // pred_check
    _
  $region11: #{tpu_custom_call.1} parent=0 // pred_check_branch
    %19 = sbr.rel (0) target = $region13
  $region12: #{tpu_custom_call.1} parent=0 // pred_region
    _
  $region13: #{tpu_custom_call.1} parent=0 // pred_fallthru
    _
  // Predicated region
  $region14: #{tpu_custom_call.1} parent=0 // pred_check
    _
  $region15: #{tpu_custom_call.1} parent=0 // pred_check_branch
    %21 = sbr.rel (0) target = $region17
  $region16: #{tpu_custom_call.1} parent=0 // pred_region
    _
  $region17: #{tpu_custom_call.1} parent=0 // pred_fallthru
    _
  // Predicated region
  $region18: #{tpu_custom_call.1} parent=0 // pred_check
    _
  $region19: #{tpu_custom_call.1} parent=0 // pred_check_branch
    %23 = sbr.rel (0) target = $region21
  $region20: #{tpu_custom_call.1} parent=0 // pred_region
    _
  $region21: #{tpu_custom_call.1} parent=0 // pred_fallthru
    _
  // Predicated region
  $region22: #{tpu_custom_call.1} parent=0 // pred_check
    _
  $region23: #{tpu_custom_call.1} parent=0 // pred_check_branch
    %25 = sbr.rel (0) target = $region25
  $region24: #{tpu_custom_call.1} parent=0 // pred_region
    _
  $region25: #{tpu_custom_call.1} parent=0 // pred_fallthru
    _
  // Predicated region
  $region26: #{tpu_custom_call.1} parent=0 // pred_check
    _
  $region27: #{tpu_custom_call.1} parent=0 // pred_check_branch
    %27 = sbr.rel (0) target = $region29
  $region28: #{tpu_custom_call.1} parent=0 // pred_region
    _
  $region29: #{tpu_custom_call.1} parent=0 // pred_fallthru
    _
  // Predicated region
  $region30: #{tpu_custom_call.1} parent=0 // pred_check
    _
  $region31: #{tpu_custom_call.1} parent=0 // pred_check_branch
    %29 = sbr.rel (0) target = $region33
  $region32: #{tpu_custom_call.1} parent=0 // pred_region
    _
  $region33: #{tpu_custom_call.1} parent=0 // pred_fallthru
    _
  // Predicated region
  $region34: #{tpu_custom_call.1} parent=0 // pred_check
    _
  $region35: #{tpu_custom_call.1} parent=0 // pred_check_branch
    %31 = sbr.rel (0) target = $region37
  $region36: #{tpu_custom_call.1} parent=0 // pred_region
    _
  $region37: #{tpu_custom_call.1} parent=0 // pred_fallthru
    _
  %v32 = vld [vmem:[%s1] sm:$0xff]
  %v33 = vld [vmem:[%s1 + $0x8] sm:$0xff]
  %v34 = vld [vmem:[%s0] sm:$0xff]
  %v35 = vld [vmem:[%s0 + $0x8] sm:$0xff]
  %v36 = vld [vmem:[%s2] sm:$0xff]
  %v37 = vld [vmem:[%s2 + $0x8] sm:$0xff]
  %v38 = vld [vmem:[%s2 + $0x10] sm:$0xff]
  %v39 = vld [vmem:[%s2 + $0x18] sm:$0xff]
  %v40 = vld [vmem:[%s3] sm:$0x3]
  %vm41 = vcmask 261120
  %v43 = vsel %vm41, %v34, 0
  %v46 = vsel %vm41, %v35, 0
  %48 = vmatprep.subr.mxu0 0.0
  %49 = vmatpush1.msra.mxu0 %v36
  %50 = vmatprep.subr.mxu0 0.0
  %51 = vmatpush1.msra.mxu0 %v37
  %52 = vmatprep.subr.mxu0 0.0
  %53 = vmatpush1.msra.mxu0 %v38
  %54 = vmatprep.subr.mxu0 0.0
  %55 = vmatpush1.msra.mxu0 %v39
  %56 = vmatprep.subr.mxu0 0.0
  %57 = vmatpush1.msra.mxu0 0.0
  %58 = vmatprep.subr.mxu0 0.0
  %59 = vmatpush1.msra.mxu0 0.0
  %60 = vmatprep.subr.mxu0 0.0
  %61 = vmatpush1.msra.mxu0 0.0
  %62 = vmatprep.subr.mxu0 0.0
  %63 = vmatpush1.msra.mxu0 0.0
  %64 = vmatprep.subr.mxu0 0.0
  %65 = vmatpush1.msra.mxu0 0.0
  %66 = vmatprep.subr.mxu0 0.0
  %67 = vmatpush1.msra.mxu0 0.0
  %68 = vmatprep.subr.mxu0 0.0
  %69 = vmatpush1.msra.mxu0 0.0
  %70 = vmatprep.subr.mxu0 0.0
  %71 = vmatpush1.msra.mxu0 0.0
  %72 = vmatprep.subr.mxu0 0.0
  %73 = vmatpush1.msra.mxu0 0.0
  %74 = vmatprep.subr.mxu0 0.0
  %75 = vmatpush1.msra.mxu0 0.0
  %76 = vmatprep.subr.mxu0 0.0
  %77 = vmatpush1.msra.mxu0 0.0
  %78 = vmatprep.subr.mxu0 0.0
  %79 = vmatpush1.msra.mxu0 0.0
  %80 = vmatprep.subr.mxu0 0.0
  %81 = vmatpush1.msra.mxu0 0.0
  %82 = vmatprep.subr.mxu0 0.0
  %83 = vmatpush1.msra.mxu0 0.0
  %84 = vmatprep.subr.mxu0 0.0
  %85 = vmatpush1.msra.mxu0 0.0
  %86 = vmatprep.subr.mxu0 0.0
  %87 = vmatpush1.msra.mxu0 0.0
  %88 = vmatprep.subr.mxu0 0.0
  %89 = vmatpush1.msra.mxu0 0.0
  %90 = vmatprep.subr.mxu0 0.0
  %91 = vmatpush1.msra.mxu0 0.0
  %92 = vmatprep.subr.mxu0 0.0
  %93 = vmatpush1.msra.mxu0 0.0
  %94 = vmatprep.subr.mxu0 0.0
  %95 = vmatpush1.msra.mxu0 0.0
  %96 = vmatprep.subr.mxu0 0.0
  %97 = vmatpush1.msra.mxu0 0.0
  %98 = vmatprep.subr.mxu0 0.0
  %99 = vmatpush1.msra.mxu0 0.0
  %100 = vmatprep.subr.mxu0 0.0
  %101 = vmatpush1.msra.mxu0 0.0
  %102 = vmatprep.subr.mxu0 0.0
  %103 = vmatpush1.msra.mxu0 0.0
  %104 = vmatprep.subr.mxu0 0.0
  %105 = vmatpush1.msra.mxu0 0.0
  %106 = vmatprep.subr.mxu0 0.0
  %107 = vmatpush1.msra.mxu0 0.0
  %108 = vmatprep.subr.mxu0 0.0
  %109 = vmatpush1.msra.mxu0 0.0
  %110 = vmatprep.subr.mxu0 0.0
  %111 = vmatpush1.msra.mxu0 0.0
  %112 = vmatprep.mubr.f32.mxu0 0.0
  %113 = vmatmul.mubr.f32.gmra.mrb[0].mxu0 %v43
  %v114 = vpop.f32.mrb[0].mxu0
  %v115 = vadd.f32 0.0, %v114
  %v116 = vpop.f32.mrb[0].mxu0
  %117 = vmatprep.mubr.f32.mxu0 0.0
  %118 = vmatmul.mubr.f32.gmra.mrb[0].mxu0 %v46
  %v119 = vpop.f32.mrb[0].mxu0
  %v120 = vadd.f32 0.0, %v119
  %v121 = vpop.f32.mrb[0].mxu0
  %122 = vdwg.mxu0
  %v124 = vsel %vm41, %v40, 0
  %126 = vmatprep.subr.mxu0 0.0
  %127 = vmatpush1.xpose.msra.mxu0 %v43
  %128 = vmatprep.subr.mxu0 0.0
  %129 = vmatpush1.xpose.msra.mxu0 %v46
  %130 = vmatprep.subr.mxu0 0.0
  %131 = vmatpush1.xpose.msra.mxu0 0.0
  %132 = vmatprep.subr.mxu0 0.0
  %133 = vmatpush1.xpose.msra.mxu0 0.0
  %134 = vmatprep.subr.mxu0 0.0
  %135 = vmatpush1.xpose.msra.mxu0 0.0
  %136 = vmatprep.subr.mxu0 0.0
  %137 = vmatpush1.xpose.msra.mxu0 0.0
  %138 = vmatprep.subr.mxu0 0.0
  %139 = vmatpush1.xpose.msra.mxu0 0.0
  %140 = vmatprep.subr.mxu0 0.0
  %141 = vmatpush1.xpose.msra.mxu0 0.0
  %142 = vmatprep.subr.mxu0 0.0
  %143 = vmatpush1.xpose.msra.mxu0 0.0
  %144 = vmatprep.subr.mxu0 0.0
  %145 = vmatpush1.xpose.msra.mxu0 0.0
  %146 = vmatprep.subr.mxu0 0.0
  %147 = vmatpush1.xpose.msra.mxu0 0.0
  %148 = vmatprep.subr.mxu0 0.0
  %149 = vmatpush1.xpose.msra.mxu0 0.0
  %150 = vmatprep.subr.mxu0 0.0
  %151 = vmatpush1.xpose.msra.mxu0 0.0
  %152 = vmatprep.subr.mxu0 0.0
  %153 = vmatpush1.xpose.msra.mxu0 0.0
  %154 = vmatprep.subr.mxu0 0.0
  %155 = vmatpush1.xpose.msra.mxu0 0.0
  %156 = vmatprep.subr.mxu0 0.0
  %157 = vmatpush1.xpose.msra.mxu0 0.0
  %158 = vmatprep.subr.mxu0 0.0
  %159 = vmatpush1.xpose.msra.mxu0 0.0
  %160 = vmatprep.subr.mxu0 0.0
  %161 = vmatpush1.xpose.msra.mxu0 0.0
  %162 = vmatprep.subr.mxu0 0.0
  %163 = vmatpush1.xpose.msra.mxu0 0.0
  %164 = vmatprep.subr.mxu0 0.0
  %165 = vmatpush1.xpose.msra.mxu0 0.0
  %166 = vmatprep.subr.mxu0 0.0
  %167 = vmatpush1.xpose.msra.mxu0 0.0
  %168 = vmatprep.subr.mxu0 0.0
  %169 = vmatpush1.xpose.msra.mxu0 0.0
  %170 = vmatprep.subr.mxu0 0.0
  %171 = vmatpush1.xpose.msra.mxu0 0.0
  %172 = vmatprep.subr.mxu0 0.0
  %173 = vmatpush1.xpose.msra.mxu0 0.0
  %174 = vmatprep.subr.mxu0 0.0
  %175 = vmatpush1.xpose.msra.mxu0 0.0
  %176 = vmatprep.subr.mxu0 0.0
  %177 = vmatpush1.xpose.msra.mxu0 0.0
  %178 = vmatprep.subr.mxu0 0.0
  %179 = vmatpush1.xpose.msra.mxu0 0.0
  %180 = vmatprep.subr.mxu0 0.0
  %181 = vmatpush1.xpose.msra.mxu0 0.0
  %182 = vmatprep.subr.mxu0 0.0
  %183 = vmatpush1.xpose.msra.mxu0 0.0
  %184 = vmatprep.subr.mxu0 0.0
  %185 = vmatpush1.xpose.msra.mxu0 0.0
  %186 = vmatprep.subr.mxu0 0.0
  %187 = vmatpush1.xpose.msra.mxu0 0.0
  %188 = vmatprep.subr.mxu0 0.0
  %189 = vmatpush1.xpose.msra.mxu0 0.0
  %190 = vmatprep.mubr.f32.mxu0 0.0
  %191 = vmatmul.mubr.f32.gmra.mrb[0].mxu0 %v124
  %v192 = vpop.f32.mrb[0].mxu0
  %v193 = vadd.f32 0.0, %v192
  %v194 = vpop.f32.mrb[0].mxu0
  %195 = vdwg.mxu0
  %197 = vset.pattern.permute.xlu0 16
  %198 = vperm.xlu0 %197, %v115
  %v199 = vpop.permute.xlu0 %198
  %202 = vset.pattern.permute.xlu0 16
  %203 = vperm.xlu0 %202, %v120
  %v204 = vpop.permute.xlu0 %203
  %v206 = vlaneseq
  %v207 = vshrl.u32 %v206, 7
  %v208 = vsub.s32 0, %v207
  %v209 = vrot.slane %v193, %v208
  %v210 = vadd.f32 %v199, %v209
  %v211 = vadd.f32 %v204, %v209
  %vm212 = vcmp.gt.f32.partialorder %v210, 0.0
  %vm213 = vcmp.gt.f32.partialorder %v211, 0.0
  %v214 = vmul.f32 %v210, 0.2
  %v215 = vmul.f32 %v211, 0.2
  %v216 = vsel %vm212, %v210, %v214
  %v217 = vsel %vm213, %v211, %v215
  %vm218 = vcmask 130048
  %v219 = vsel %vm218, %v216, -inf
  %220 = vmax.xlane.f32.xlu0 %v219
  %v221 = vpop.xlane.xlu0 %220
  %v222 = vsel %vm218, %v217, -inf
  %223 = vmax.xlane.f32.xlu0 %v222
  %v224 = vpop.xlane.xlu0 %223
  %v225 = vsub.f32 %v216, %v221
  %v226 = vsub.f32 %v217, %v224
  %v227 = vmul.f32 %v225, 1.442695
  %v228 = vpow.pop %v227
  %v229 = vmul.f32 %v226, 1.442695
  %v230 = vpow.pop %v229
  %v231 = vmul.f32 %v228, %v32
  %v232 = vmul.f32 %v230, %v33
  %v233 = vsel %vm218, %v231, 0.0
  %234 = vadd.xlane.f32.xlu0 %v233
  %v235 = vpop.xlane.xlu0 %234
  %v236 = vsel %vm218, %v232, 0.0
  %237 = vadd.xlane.f32.xlu0 %v236
  %v238 = vpop.xlane.xlu0 %237
  %v239 = vrcp.pop %v235
  %v240 = vmul.f32 %v231, %v239
  %v241 = vrcp.pop %v238
  %v242 = vmul.f32 %v232, %v241
  %v244 = vsel %vm218, %v240, 0
  %v247 = vsel %vm218, %v242, 0
  %249 = vmatprep.subr.mxu0 0.0
  %250 = vmatpush1.msra.mxu0 %v115
  %251 = vmatprep.subr.mxu0 0.0
  %252 = vmatpush1.msra.mxu0 %v120
  %253 = vmatprep.subr.mxu0 0.0
  %254 = vmatpush1.msra.mxu0 0.0
  %255 = vmatprep.subr.mxu0 0.0
  %256 = vmatpush1.msra.mxu0 0.0
  %257 = vmatprep.subr.mxu0 0.0
  %258 = vmatpush1.msra.mxu0 0.0
  %259 = vmatprep.subr.mxu0 0.0
  %260 = vmatpush1.msra.mxu0 0.0
  %261 = vmatprep.subr.mxu0 0.0
  %262 = vmatpush1.msra.mxu0 0.0
  %263 = vmatprep.subr.mxu0 0.0
  %264 = vmatpush1.msra.mxu0 0.0
  %265 = vmatprep.subr.mxu0 0.0
  %266 = vmatpush1.msra.mxu0 0.0
  %267 = vmatprep.subr.mxu0 0.0
  %268 = vmatpush1.msra.mxu0 0.0
  %269 = vmatprep.subr.mxu0 0.0
  %270 = vmatpush1.msra.mxu0 0.0
  %271 = vmatprep.subr.mxu0 0.0
  %272 = vmatpush1.msra.mxu0 0.0
  %273 = vmatprep.subr.mxu0 0.0
  %274 = vmatpush1.msra.mxu0 0.0
  %275 = vmatprep.subr.mxu0 0.0
  %276 = vmatpush1.msra.mxu0 0.0
  %277 = vmatprep.subr.mxu0 0.0
  %278 = vmatpush1.msra.mxu0 0.0
  %279 = vmatprep.subr.mxu0 0.0
  %280 = vmatpush1.msra.mxu0 0.0
  %281 = vmatprep.subr.mxu0 0.0
  %282 = vmatpush1.msra.mxu0 0.0
  %283 = vmatprep.subr.mxu0 0.0
  %284 = vmatpush1.msra.mxu0 0.0
  %285 = vmatprep.subr.mxu0 0.0
  %286 = vmatpush1.msra.mxu0 0.0
  %287 = vmatprep.subr.mxu0 0.0
  %288 = vmatpush1.msra.mxu0 0.0
  %289 = vmatprep.subr.mxu0 0.0
  %290 = vmatpush1.msra.mxu0 0.0
  %291 = vmatprep.subr.mxu0 0.0
  %292 = vmatpush1.msra.mxu0 0.0
  %293 = vmatprep.subr.mxu0 0.0
  %294 = vmatpush1.msra.mxu0 0.0
  %295 = vmatprep.subr.mxu0 0.0
  %296 = vmatpush1.msra.mxu0 0.0
  %297 = vmatprep.subr.mxu0 0.0
  %298 = vmatpush1.msra.mxu0 0.0
  %299 = vmatprep.subr.mxu0 0.0
  %300 = vmatpush1.msra.mxu0 0.0
  %301 = vmatprep.subr.mxu0 0.0
  %302 = vmatpush1.msra.mxu0 0.0
  %303 = vmatprep.subr.mxu0 0.0
  %304 = vmatpush1.msra.mxu0 0.0
  %305 = vmatprep.subr.mxu0 0.0
  %306 = vmatpush1.msra.mxu0 0.0
  %307 = vmatprep.subr.mxu0 0.0
  %308 = vmatpush1.msra.mxu0 0.0
  %309 = vmatprep.subr.mxu0 0.0
  %310 = vmatpush1.msra.mxu0 0.0
  %311 = vmatprep.subr.mxu0 0.0
  %312 = vmatpush1.msra.mxu0 0.0
  %313 = vmatprep.mubr.f32.mxu0 0.0
  %314 = vmatmul.mubr.f32.gmra.mrb[0].mxu0 %v244
  %v315 = vpop.f32.mrb[0].mxu0
  %v316 = vadd.f32 0.0, %v315
  %v317 = vpop.f32.mrb[0].mxu0
  %318 = vmatprep.mubr.f32.mxu0 0.0
  %319 = vmatmul.mubr.f32.gmra.mrb[0].mxu0 %v247
  %v320 = vpop.f32.mrb[0].mxu0
  %v321 = vadd.f32 0.0, %v320
  %v322 = vpop.f32.mrb[0].mxu0
  %323 = vdwg.mxu0
  %vm324 = vcmp.gt.f32.partialorder %v316, 0.0
  %vm325 = vcmp.gt.f32.partialorder %v321, 0.0
  %v326 = vmin.f32 %v316, 0.0
  %v327 = vmin.f32 %v321, 0.0
  %v328 = vmul.f32 %v326, 1.442695
  %v329 = vpow.pop %v328
  %v330 = vmul.f32 %v327, 1.442695
  %v331 = vpow.pop %v330
  %v332 = vsub.f32 %v329, 1.0
  %v333 = vsub.f32 %v331, 1.0
  %v334 = vsel %vm324, %v316, %v332
  %v335 = vsel %vm325, %v321, %v333
  %336 = vset.pattern.permute.xlu0 17
  %337 = vperm.xlu0 %336, %v115
  %v338 = vpop.permute.xlu0 %337
  %340 = vset.pattern.permute.xlu0 17
  %341 = vperm.xlu0 %340, %v120
  %v342 = vpop.permute.xlu0 %341
  %v344 = vlaneseq
  %v345 = vshrl.u32 %v344, 7
  %v346 = vsub.s32 1, %v345
  %v347 = vrot.slane %v193, %v346
  %v348 = vadd.f32 %v338, %v347
  %v349 = vadd.f32 %v342, %v347
  %vm350 = vcmp.gt.f32.partialorder %v348, 0.0
  %vm351 = vcmp.gt.f32.partialorder %v349, 0.0
  %v352 = vmul.f32 %v348, 0.2
  %v353 = vmul.f32 %v349, 0.2
  %v354 = vsel %vm350, %v348, %v352
  %v355 = vsel %vm351, %v349, %v353
  %v356 = vsel %vm218, %v354, -inf
  %357 = vmax.xlane.f32.xlu0 %v356
  %v358 = vpop.xlane.xlu0 %357
  %v359 = vsel %vm218, %v355, -inf
  %360 = vmax.xlane.f32.xlu0 %v359
  %v361 = vpop.xlane.xlu0 %360
  %v362 = vsub.f32 %v354, %v358
  %v363 = vsub.f32 %v355, %v361
  %v364 = vmul.f32 %v362, 1.442695
  %v365 = vpow.pop %v364
  %v366 = vmul.f32 %v363, 1.442695
  %v367 = vpow.pop %v366
  %v368 = vmul.f32 %v365, %v32
  %v369 = vmul.f32 %v367, %v33
  %v370 = vsel %vm218, %v368, 0.0
  %371 = vadd.xlane.f32.xlu0 %v370
  %v372 = vpop.xlane.xlu0 %371
  %v373 = vsel %vm218, %v369, 0.0
  %374 = vadd.xlane.f32.xlu0 %v373
  %v375 = vpop.xlane.xlu0 %374
  %v376 = vrcp.pop %v372
  %v377 = vmul.f32 %v368, %v376
  %v378 = vrcp.pop %v375
  %v379 = vmul.f32 %v369, %v378
  %380 = vrot.lane.b32.xlu0 %v115, 120
  %v381 = vpop.permute.xlu0 %380
  %382 = vrot.lane.b32.xlu0 %v120, 120
  %v383 = vpop.permute.xlu0 %382
  %v387 = vsel %vm218, %v377, 0
  %v390 = vsel %vm218, %v379, 0
  %392 = vmatprep.subr.mxu0 0.0
  %393 = vmatpush1.msra.mxu0 %v381
  %394 = vmatprep.subr.mxu0 0.0
  %395 = vmatpush1.msra.mxu0 %v383
  %396 = vmatprep.subr.mxu0 0.0
  %397 = vmatpush1.msra.mxu0 0.0
  %398 = vmatprep.subr.mxu0 0.0
  %399 = vmatpush1.msra.mxu0 0.0
  %400 = vmatprep.subr.mxu0 0.0
  %401 = vmatpush1.msra.mxu0 0.0
  %402 = vmatprep.subr.mxu0 0.0
  %403 = vmatpush1.msra.mxu0 0.0
  %404 = vmatprep.subr.mxu0 0.0
  %405 = vmatpush1.msra.mxu0 0.0
  %406 = vmatprep.subr.mxu0 0.0
  %407 = vmatpush1.msra.mxu0 0.0
  %408 = vmatprep.subr.mxu0 0.0
  %409 = vmatpush1.msra.mxu0 0.0
  %410 = vmatprep.subr.mxu0 0.0
  %411 = vmatpush1.msra.mxu0 0.0
  %412 = vmatprep.subr.mxu0 0.0
  %413 = vmatpush1.msra.mxu0 0.0
  %414 = vmatprep.subr.mxu0 0.0
  %415 = vmatpush1.msra.mxu0 0.0
  %416 = vmatprep.subr.mxu0 0.0
  %417 = vmatpush1.msra.mxu0 0.0
  %418 = vmatprep.subr.mxu0 0.0
  %419 = vmatpush1.msra.mxu0 0.0
  %420 = vmatprep.subr.mxu0 0.0
  %421 = vmatpush1.msra.mxu0 0.0
  %422 = vmatprep.subr.mxu0 0.0
  %423 = vmatpush1.msra.mxu0 0.0
  %424 = vmatprep.subr.mxu0 0.0
  %425 = vmatpush1.msra.mxu0 0.0
  %426 = vmatprep.subr.mxu0 0.0
  %427 = vmatpush1.msra.mxu0 0.0
  %428 = vmatprep.subr.mxu0 0.0
  %429 = vmatpush1.msra.mxu0 0.0
  %430 = vmatprep.subr.mxu0 0.0
  %431 = vmatpush1.msra.mxu0 0.0
  %432 = vmatprep.subr.mxu0 0.0
  %433 = vmatpush1.msra.mxu0 0.0
  %434 = vmatprep.subr.mxu0 0.0
  %435 = vmatpush1.msra.mxu0 0.0
  %436 = vmatprep.subr.mxu0 0.0
  %437 = vmatpush1.msra.mxu0 0.0
  %438 = vmatprep.subr.mxu0 0.0
  %439 = vmatpush1.msra.mxu0 0.0
  %440 = vmatprep.subr.mxu0 0.0
  %441 = vmatpush1.msra.mxu0 0.0
  %442 = vmatprep.subr.mxu0 0.0
  %443 = vmatpush1.msra.mxu0 0.0
  %444 = vmatprep.subr.mxu0 0.0
  %445 = vmatpush1.msra.mxu0 0.0
  %446 = vmatprep.subr.mxu0 0.0
  %447 = vmatpush1.msra.mxu0 0.0
  %448 = vmatprep.subr.mxu0 0.0
  %449 = vmatpush1.msra.mxu0 0.0
  %450 = vmatprep.subr.mxu0 0.0
  %451 = vmatpush1.msra.mxu0 0.0
  %452 = vmatprep.subr.mxu0 0.0
  %453 = vmatpush1.msra.mxu0 0.0
  %454 = vmatprep.subr.mxu0 0.0
  %455 = vmatpush1.msra.mxu0 0.0
  %456 = vmatprep.mubr.f32.mxu0 0.0
  %457 = vmatmul.mubr.f32.gmra.mrb[0].mxu0 %v387
  %v458 = vpop.f32.mrb[0].mxu0
  %v459 = vadd.f32 0.0, %v458
  %v460 = vpop.f32.mrb[0].mxu0
  %461 = vmatprep.mubr.f32.mxu0 0.0
  %462 = vmatmul.mubr.f32.gmra.mrb[0].mxu0 %v390
  %v463 = vpop.f32.mrb[0].mxu0
  %v464 = vadd.f32 0.0, %v463
  %v465 = vpop.f32.mrb[0].mxu0
  %466 = vdwg.mxu0
  %vm467 = vcmp.gt.f32.partialorder %v459, 0.0
  %vm468 = vcmp.gt.f32.partialorder %v464, 0.0
  %v469 = vmin.f32 %v459, 0.0
  %v470 = vmin.f32 %v464, 0.0
  %v471 = vmul.f32 %v469, 1.442695
  %v472 = vpow.pop %v471
  %v473 = vmul.f32 %v470, 1.442695
  %v474 = vpow.pop %v473
  %v475 = vsub.f32 %v472, 1.0
  %v476 = vsub.f32 %v474, 1.0
  %v477 = vsel %vm467, %v459, %v475
  %v478 = vsel %vm468, %v464, %v476
  %481 = vrot.lane.b32.xlu0 %v477, 8
  %v482 = vpop.permute.xlu0 %481
  %483 = vrot.lane.b32.xlu0 %v478, 8
  %v484 = vpop.permute.xlu0 %483
  %vm487 = vcmask 64512
  %v488 = vsel %vm487, %v334, %v482
  %v489 = vsel %vm487, %v335, %v484
  %v490 = vld [vmem:[%s4] sm:$0xff]
  %v491 = vld [vmem:[%s4 + $0x8] sm:$0xff]
  %v492 = vld [vmem:[%s5] sm:$0x3]
  %v494 = vsel %vm218, %v488, 0
  %v497 = vsel %vm218, %v489, 0
  %499 = vmatprep.subr.mxu0 0.0
  %500 = vmatpush1.msra.mxu0 %v490
  %501 = vmatprep.subr.mxu0 0.0
  %502 = vmatpush1.msra.mxu0 %v491
  %503 = vmatprep.subr.mxu0 0.0
  %504 = vmatpush1.msra.mxu0 0.0
  %505 = vmatprep.subr.mxu0 0.0
  %506 = vmatpush1.msra.mxu0 0.0
  %507 = vmatprep.subr.mxu0 0.0
  %508 = vmatpush1.msra.mxu0 0.0
  %509 = vmatprep.subr.mxu0 0.0
  %510 = vmatpush1.msra.mxu0 0.0
  %511 = vmatprep.subr.mxu0 0.0
  %512 = vmatpush1.msra.mxu0 0.0
  %513 = vmatprep.subr.mxu0 0.0
  %514 = vmatpush1.msra.mxu0 0.0
  %515 = vmatprep.subr.mxu0 0.0
  %516 = vmatpush1.msra.mxu0 0.0
  %517 = vmatprep.subr.mxu0 0.0
  %518 = vmatpush1.msra.mxu0 0.0
  %519 = vmatprep.subr.mxu0 0.0
  %520 = vmatpush1.msra.mxu0 0.0
  %521 = vmatprep.subr.mxu0 0.0
  %522 = vmatpush1.msra.mxu0 0.0
  %523 = vmatprep.subr.mxu0 0.0
  %524 = vmatpush1.msra.mxu0 0.0
  %525 = vmatprep.subr.mxu0 0.0
  %526 = vmatpush1.msra.mxu0 0.0
  %527 = vmatprep.subr.mxu0 0.0
  %528 = vmatpush1.msra.mxu0 0.0
  %529 = vmatprep.subr.mxu0 0.0
  %530 = vmatpush1.msra.mxu0 0.0
  %531 = vmatprep.subr.mxu0 0.0
  %532 = vmatpush1.msra.mxu0 0.0
  %533 = vmatprep.subr.mxu0 0.0
  %534 = vmatpush1.msra.mxu0 0.0
  %535 = vmatprep.subr.mxu0 0.0
  %536 = vmatpush1.msra.mxu0 0.0
  %537 = vmatprep.subr.mxu0 0.0
  %538 = vmatpush1.msra.mxu0 0.0
  %539 = vmatprep.subr.mxu0 0.0
  %540 = vmatpush1.msra.mxu0 0.0
  %541 = vmatprep.subr.mxu0 0.0
  %542 = vmatpush1.msra.mxu0 0.0
  %543 = vmatprep.subr.mxu0 0.0
  %544 = vmatpush1.msra.mxu0 0.0
  %545 = vmatprep.subr.mxu0 0.0
  %546 = vmatpush1.msra.mxu0 0.0
  %547 = vmatprep.subr.mxu0 0.0
  %548 = vmatpush1.msra.mxu0 0.0
  %549 = vmatprep.subr.mxu0 0.0
  %550 = vmatpush1.msra.mxu0 0.0
  %551 = vmatprep.subr.mxu0 0.0
  %552 = vmatpush1.msra.mxu0 0.0
  %553 = vmatprep.subr.mxu0 0.0
  %554 = vmatpush1.msra.mxu0 0.0
  %555 = vmatprep.subr.mxu0 0.0
  %556 = vmatpush1.msra.mxu0 0.0
  %557 = vmatprep.subr.mxu0 0.0
  %558 = vmatpush1.msra.mxu0 0.0
  %559 = vmatprep.subr.mxu0 0.0
  %560 = vmatpush1.msra.mxu0 0.0
  %561 = vmatprep.subr.mxu0 0.0
  %562 = vmatpush1.msra.mxu0 0.0
  %563 = vmatprep.mubr.f32.mxu0 0.0
  %564 = vmatmul.mubr.f32.gmra.mrb[0].mxu0 %v494
  %v565 = vpop.f32.mrb[0].mxu0
  %v566 = vadd.f32 0.0, %v565
  %v567 = vpop.f32.mrb[0].mxu0
  %568 = vmatprep.mubr.f32.mxu0 0.0
  %569 = vmatmul.mubr.f32.gmra.mrb[0].mxu0 %v497
  %v570 = vpop.f32.mrb[0].mxu0
  %v571 = vadd.f32 0.0, %v570
  %v572 = vpop.f32.mrb[0].mxu0
  %573 = vdwg.mxu0
  %v575 = vsel %vm218, %v492, 0
  %577 = vmatprep.subr.mxu0 0.0
  %578 = vmatpush1.xpose.msra.mxu0 %v494
  %579 = vmatprep.subr.mxu0 0.0
  %580 = vmatpush1.xpose.msra.mxu0 %v497
  %581 = vmatprep.subr.mxu0 0.0
  %582 = vmatpush1.xpose.msra.mxu0 0.0
  %583 = vmatprep.subr.mxu0 0.0
  %584 = vmatpush1.xpose.msra.mxu0 0.0
  %585 = vmatprep.subr.mxu0 0.0
  %586 = vmatpush1.xpose.msra.mxu0 0.0
  %587 = vmatprep.subr.mxu0 0.0
  %588 = vmatpush1.xpose.msra.mxu0 0.0
  %589 = vmatprep.subr.mxu0 0.0
  %590 = vmatpush1.xpose.msra.mxu0 0.0
  %591 = vmatprep.subr.mxu0 0.0
  %592 = vmatpush1.xpose.msra.mxu0 0.0
  %593 = vmatprep.subr.mxu0 0.0
  %594 = vmatpush1.xpose.msra.mxu0 0.0
  %595 = vmatprep.subr.mxu0 0.0
  %596 = vmatpush1.xpose.msra.mxu0 0.0
  %597 = vmatprep.subr.mxu0 0.0
  %598 = vmatpush1.xpose.msra.mxu0 0.0
  %599 = vmatprep.subr.mxu0 0.0
  %600 = vmatpush1.xpose.msra.mxu0 0.0
  %601 = vmatprep.subr.mxu0 0.0
  %602 = vmatpush1.xpose.msra.mxu0 0.0
  %603 = vmatprep.subr.mxu0 0.0
  %604 = vmatpush1.xpose.msra.mxu0 0.0
  %605 = vmatprep.subr.mxu0 0.0
  %606 = vmatpush1.xpose.msra.mxu0 0.0
  %607 = vmatprep.subr.mxu0 0.0
  %608 = vmatpush1.xpose.msra.mxu0 0.0
  %609 = vmatprep.subr.mxu0 0.0
  %610 = vmatpush1.xpose.msra.mxu0 0.0
  %611 = vmatprep.subr.mxu0 0.0
  %612 = vmatpush1.xpose.msra.mxu0 0.0
  %613 = vmatprep.subr.mxu0 0.0
  %614 = vmatpush1.xpose.msra.mxu0 0.0
  %615 = vmatprep.subr.mxu0 0.0
  %616 = vmatpush1.xpose.msra.mxu0 0.0
  %617 = vmatprep.subr.mxu0 0.0
  %618 = vmatpush1.xpose.msra.mxu0 0.0
  %619 = vmatprep.subr.mxu0 0.0
  %620 = vmatpush1.xpose.msra.mxu0 0.0
  %621 = vmatprep.subr.mxu0 0.0
  %622 = vmatpush1.xpose.msra.mxu0 0.0
  %623 = vmatprep.subr.mxu0 0.0
  %624 = vmatpush1.xpose.msra.mxu0 0.0
  %625 = vmatprep.subr.mxu0 0.0
  %626 = vmatpush1.xpose.msra.mxu0 0.0
  %627 = vmatprep.subr.mxu0 0.0
  %628 = vmatpush1.xpose.msra.mxu0 0.0
  %629 = vmatprep.subr.mxu0 0.0
  %630 = vmatpush1.xpose.msra.mxu0 0.0
  %631 = vmatprep.subr.mxu0 0.0
  %632 = vmatpush1.xpose.msra.mxu0 0.0
  %633 = vmatprep.subr.mxu0 0.0
  %634 = vmatpush1.xpose.msra.mxu0 0.0
  %635 = vmatprep.subr.mxu0 0.0
  %636 = vmatpush1.xpose.msra.mxu0 0.0
  %637 = vmatprep.subr.mxu0 0.0
  %638 = vmatpush1.xpose.msra.mxu0 0.0
  %639 = vmatprep.subr.mxu0 0.0
  %640 = vmatpush1.xpose.msra.mxu0 0.0
  %641 = vmatprep.mubr.f32.mxu0 0.0
  %642 = vmatmul.mubr.f32.gmra.mrb[0].mxu0 %v575
  %v643 = vpop.f32.mrb[0].mxu0
  %v644 = vadd.f32 0.0, %v643
  %v645 = vpop.f32.mrb[0].mxu0
  %646 = vdwg.mxu0
  %648 = vset.pattern.permute.xlu0 16
  %649 = vperm.xlu0 %648, %v566
  %v650 = vpop.permute.xlu0 %649
  %653 = vset.pattern.permute.xlu0 16
  %654 = vperm.xlu0 %653, %v571
  %v655 = vpop.permute.xlu0 %654
  %v657 = vlaneseq
  %v658 = vshrl.u32 %v657, 7
  %v659 = vsub.s32 0, %v658
  %v660 = vrot.slane %v644, %v659
  %v661 = vadd.f32 %v650, %v660
  %v662 = vadd.f32 %v655, %v660
  %vm663 = vcmp.gt.f32.partialorder %v661, 0.0
  %vm664 = vcmp.gt.f32.partialorder %v662, 0.0
  %v665 = vmul.f32 %v661, 0.2
  %v666 = vmul.f32 %v662, 0.2
  %v667 = vsel %vm663, %v661, %v665
  %v668 = vsel %vm664, %v662, %v666
  %v669 = vsel %vm218, %v667, -inf
  %670 = vmax.xlane.f32.xlu0 %v669
  %v671 = vpop.xlane.xlu0 %670
  %v672 = vsel %vm218, %v668, -inf
  %673 = vmax.xlane.f32.xlu0 %v672
  %v674 = vpop.xlane.xlu0 %673
  %v675 = vsub.f32 %v667, %v671
  %v676 = vsub.f32 %v668, %v674
  %v677 = vmul.f32 %v675, 1.442695
  %v678 = vpow.pop %v677
  %v679 = vmul.f32 %v676, 1.442695
  %v680 = vpow.pop %v679
  %v681 = vmul.f32 %v678, %v32
  %v682 = vmul.f32 %v680, %v33
  %v683 = vsel %vm218, %v681, 0.0
  %684 = vadd.xlane.f32.xlu0 %v683
  %v685 = vpop.xlane.xlu0 %684
  %v686 = vsel %vm218, %v682, 0.0
  %687 = vadd.xlane.f32.xlu0 %v686
  %v688 = vpop.xlane.xlu0 %687
  %v689 = vrcp.pop %v685
  %v690 = vmul.f32 %v681, %v689
  %v691 = vrcp.pop %v688
  %v692 = vmul.f32 %v682, %v691
  %v694 = vsel %vm218, %v690, 0
  %v697 = vsel %vm218, %v692, 0
  %699 = vmatprep.subr.mxu0 0.0
  %700 = vmatpush1.msra.mxu0 %v566
  %701 = vmatprep.subr.mxu0 0.0
  %702 = vmatpush1.msra.mxu0 %v571
  %703 = vmatprep.subr.mxu0 0.0
  %704 = vmatpush1.msra.mxu0 0.0
  %705 = vmatprep.subr.mxu0 0.0
  %706 = vmatpush1.msra.mxu0 0.0
  %707 = vmatprep.subr.mxu0 0.0
  %708 = vmatpush1.msra.mxu0 0.0
  %709 = vmatprep.subr.mxu0 0.0
  %710 = vmatpush1.msra.mxu0 0.0
  %711 = vmatprep.subr.mxu0 0.0
  %712 = vmatpush1.msra.mxu0 0.0
  %713 = vmatprep.subr.mxu0 0.0
  %714 = vmatpush1.msra.mxu0 0.0
  %715 = vmatprep.subr.mxu0 0.0
  %716 = vmatpush1.msra.mxu0 0.0
  %717 = vmatprep.subr.mxu0 0.0
  %718 = vmatpush1.msra.mxu0 0.0
  %719 = vmatprep.subr.mxu0 0.0
  %720 = vmatpush1.msra.mxu0 0.0
  %721 = vmatprep.subr.mxu0 0.0
  %722 = vmatpush1.msra.mxu0 0.0
  %723 = vmatprep.subr.mxu0 0.0
  %724 = vmatpush1.msra.mxu0 0.0
  %725 = vmatprep.subr.mxu0 0.0
  %726 = vmatpush1.msra.mxu0 0.0
  %727 = vmatprep.subr.mxu0 0.0
  %728 = vmatpush1.msra.mxu0 0.0
  %729 = vmatprep.subr.mxu0 0.0
  %730 = vmatpush1.msra.mxu0 0.0
  %731 = vmatprep.subr.mxu0 0.0
  %732 = vmatpush1.msra.mxu0 0.0
  %733 = vmatprep.subr.mxu0 0.0
  %734 = vmatpush1.msra.mxu0 0.0
  %735 = vmatprep.subr.mxu0 0.0
  %736 = vmatpush1.msra.mxu0 0.0
  %737 = vmatprep.subr.mxu0 0.0
  %738 = vmatpush1.msra.mxu0 0.0
  %739 = vmatprep.subr.mxu0 0.0
  %740 = vmatpush1.msra.mxu0 0.0
  %741 = vmatprep.subr.mxu0 0.0
  %742 = vmatpush1.msra.mxu0 0.0
  %743 = vmatprep.subr.mxu0 0.0
  %744 = vmatpush1.msra.mxu0 0.0
  %745 = vmatprep.subr.mxu0 0.0
  %746 = vmatpush1.msra.mxu0 0.0
  %747 = vmatprep.subr.mxu0 0.0
  %748 = vmatpush1.msra.mxu0 0.0
  %749 = vmatprep.subr.mxu0 0.0
  %750 = vmatpush1.msra.mxu0 0.0
  %751 = vmatprep.subr.mxu0 0.0
  %752 = vmatpush1.msra.mxu0 0.0
  %753 = vmatprep.subr.mxu0 0.0
  %754 = vmatpush1.msra.mxu0 0.0
  %755 = vmatprep.subr.mxu0 0.0
  %756 = vmatpush1.msra.mxu0 0.0
  %757 = vmatprep.subr.mxu0 0.0
  %758 = vmatpush1.msra.mxu0 0.0
  %759 = vmatprep.subr.mxu0 0.0
  %760 = vmatpush1.msra.mxu0 0.0
  %761 = vmatprep.subr.mxu0 0.0
  %762 = vmatpush1.msra.mxu0 0.0
  %763 = vmatprep.mubr.f32.mxu0 0.0
  %764 = vmatmul.mubr.f32.gmra.mrb[0].mxu0 %v694
  %v765 = vpop.f32.mrb[0].mxu0
  %v766 = vadd.f32 0.0, %v765
  %v767 = vpop.f32.mrb[0].mxu0
  %768 = vmatprep.mubr.f32.mxu0 0.0
  %769 = vmatmul.mubr.f32.gmra.mrb[0].mxu0 %v697
  %v770 = vpop.f32.mrb[0].mxu0
  %v771 = vadd.f32 0.0, %v770
  %v772 = vpop.f32.mrb[0].mxu0
  %773 = vdwg.mxu0
  %vm774 = vcmp.gt.f32.partialorder %v766, 0.0
  %vm775 = vcmp.gt.f32.partialorder %v771, 0.0
  %v776 = vmin.f32 %v766, 0.0
  %v777 = vmin.f32 %v771, 0.0
  %v778 = vmul.f32 %v776, 1.442695
  %v779 = vpow.pop %v778
  %v780 = vmul.f32 %v777, 1.442695
  %v781 = vpow.pop %v780
  %v782 = vsub.f32 %v779, 1.0
  %v783 = vsub.f32 %v781, 1.0
  %v784 = vsel %vm774, %v766, %v782
  %v785 = vsel %vm775, %v771, %v783
  %786 = vset.pattern.permute.xlu0 17
  %787 = vperm.xlu0 %786, %v566
  %v788 = vpop.permute.xlu0 %787
  %790 = vset.pattern.permute.xlu0 17
  %791 = vperm.xlu0 %790, %v571
  %v792 = vpop.permute.xlu0 %791
  %v794 = vlaneseq
  %v795 = vshrl.u32 %v794, 7
  %v796 = vsub.s32 1, %v795
  %v797 = vrot.slane %v644, %v796
  %v798 = vadd.f32 %v788, %v797
  %v799 = vadd.f32 %v792, %v797
  %vm800 = vcmp.gt.f32.partialorder %v798, 0.0
  %vm801 = vcmp.gt.f32.partialorder %v799, 0.0
  %v802 = vmul.f32 %v798, 0.2
  %v803 = vmul.f32 %v799, 0.2
  %v804 = vsel %vm800, %v798, %v802
  %v805 = vsel %vm801, %v799, %v803
  %v806 = vsel %vm218, %v804, -inf
  %807 = vmax.xlane.f32.xlu0 %v806
  %v808 = vpop.xlane.xlu0 %807
  %v809 = vsel %vm218, %v805, -inf
  %810 = vmax.xlane.f32.xlu0 %v809
  %v811 = vpop.xlane.xlu0 %810
  %v812 = vsub.f32 %v804, %v808
  %v813 = vsub.f32 %v805, %v811
  %v814 = vmul.f32 %v812, 1.442695
  %v815 = vpow.pop %v814
  %v816 = vmul.f32 %v813, 1.442695
  %v817 = vpow.pop %v816
  %v818 = vmul.f32 %v815, %v32
  %v819 = vmul.f32 %v817, %v33
  %v820 = vsel %vm218, %v818, 0.0
  %821 = vadd.xlane.f32.xlu0 %v820
  %v822 = vpop.xlane.xlu0 %821
  %v823 = vsel %vm218, %v819, 0.0
  %824 = vadd.xlane.f32.xlu0 %v823
  %v825 = vpop.xlane.xlu0 %824
  %v826 = vrcp.pop %v822
  %v827 = vmul.f32 %v818, %v826
  %v828 = vrcp.pop %v825
  %v829 = vmul.f32 %v819, %v828
  %830 = vrot.lane.b32.xlu0 %v566, 120
  %v831 = vpop.permute.xlu0 %830
  %832 = vrot.lane.b32.xlu0 %v571, 120
  %v833 = vpop.permute.xlu0 %832
  %v837 = vsel %vm218, %v827, 0
  %v840 = vsel %vm218, %v829, 0
  %842 = vmatprep.subr.mxu0 0.0
  %843 = vmatpush1.msra.mxu0 %v831
  %844 = vmatprep.subr.mxu0 0.0
  %845 = vmatpush1.msra.mxu0 %v833
  %846 = vmatprep.subr.mxu0 0.0
  %847 = vmatpush1.msra.mxu0 0.0
  %848 = vmatprep.subr.mxu0 0.0
  %849 = vmatpush1.msra.mxu0 0.0
  %850 = vmatprep.subr.mxu0 0.0
  %851 = vmatpush1.msra.mxu0 0.0
  %852 = vmatprep.subr.mxu0 0.0
  %853 = vmatpush1.msra.mxu0 0.0
  %854 = vmatprep.subr.mxu0 0.0
  %855 = vmatpush1.msra.mxu0 0.0
  %856 = vmatprep.subr.mxu0 0.0
  %857 = vmatpush1.msra.mxu0 0.0
  %858 = vmatprep.subr.mxu0 0.0
  %859 = vmatpush1.msra.mxu0 0.0
  %860 = vmatprep.subr.mxu0 0.0
  %861 = vmatpush1.msra.mxu0 0.0
  %862 = vmatprep.subr.mxu0 0.0
  %863 = vmatpush1.msra.mxu0 0.0
  %864 = vmatprep.subr.mxu0 0.0
  %865 = vmatpush1.msra.mxu0 0.0
  %866 = vmatprep.subr.mxu0 0.0
  %867 = vmatpush1.msra.mxu0 0.0
  %868 = vmatprep.subr.mxu0 0.0
  %869 = vmatpush1.msra.mxu0 0.0
  %870 = vmatprep.subr.mxu0 0.0
  %871 = vmatpush1.msra.mxu0 0.0
  %872 = vmatprep.subr.mxu0 0.0
  %873 = vmatpush1.msra.mxu0 0.0
  %874 = vmatprep.subr.mxu0 0.0
  %875 = vmatpush1.msra.mxu0 0.0
  %876 = vmatprep.subr.mxu0 0.0
  %877 = vmatpush1.msra.mxu0 0.0
  %878 = vmatprep.subr.mxu0 0.0
  %879 = vmatpush1.msra.mxu0 0.0
  %880 = vmatprep.subr.mxu0 0.0
  %881 = vmatpush1.msra.mxu0 0.0
  %882 = vmatprep.subr.mxu0 0.0
  %883 = vmatpush1.msra.mxu0 0.0
  %884 = vmatprep.subr.mxu0 0.0
  %885 = vmatpush1.msra.mxu0 0.0
  %886 = vmatprep.subr.mxu0 0.0
  %887 = vmatpush1.msra.mxu0 0.0
  %888 = vmatprep.subr.mxu0 0.0
  %889 = vmatpush1.msra.mxu0 0.0
  %890 = vmatprep.subr.mxu0 0.0
  %891 = vmatpush1.msra.mxu0 0.0
  %892 = vmatprep.subr.mxu0 0.0
  %893 = vmatpush1.msra.mxu0 0.0
  %894 = vmatprep.subr.mxu0 0.0
  %895 = vmatpush1.msra.mxu0 0.0
  %896 = vmatprep.subr.mxu0 0.0
  %897 = vmatpush1.msra.mxu0 0.0
  %898 = vmatprep.subr.mxu0 0.0
  %899 = vmatpush1.msra.mxu0 0.0
  %900 = vmatprep.subr.mxu0 0.0
  %901 = vmatpush1.msra.mxu0 0.0
  %902 = vmatprep.subr.mxu0 0.0
  %903 = vmatpush1.msra.mxu0 0.0
  %904 = vmatprep.subr.mxu0 0.0
  %905 = vmatpush1.msra.mxu0 0.0
  %906 = vmatprep.mubr.f32.mxu0 0.0
  %907 = vmatmul.mubr.f32.gmra.mrb[0].mxu0 %v837
  %v908 = vpop.f32.mrb[0].mxu0
  %v909 = vadd.f32 0.0, %v908
  %v910 = vpop.f32.mrb[0].mxu0
  %911 = vmatprep.mubr.f32.mxu0 0.0
  %912 = vmatmul.mubr.f32.gmra.mrb[0].mxu0 %v840
  %v913 = vpop.f32.mrb[0].mxu0
  %v914 = vadd.f32 0.0, %v913
  %v915 = vpop.f32.mrb[0].mxu0
  %916 = vdwg.mxu0
  %vm917 = vcmp.gt.f32.partialorder %v909, 0.0
  %vm918 = vcmp.gt.f32.partialorder %v914, 0.0
  %v919 = vmin.f32 %v909, 0.0
  %v920 = vmin.f32 %v914, 0.0
  %v921 = vmul.f32 %v919, 1.442695
  %v922 = vpow.pop %v921
  %v923 = vmul.f32 %v920, 1.442695
  %v924 = vpow.pop %v923
  %v925 = vsub.f32 %v922, 1.0
  %v926 = vsub.f32 %v924, 1.0
  %v927 = vsel %vm917, %v909, %v925
  %v928 = vsel %vm918, %v914, %v926
  %931 = vrot.lane.b32.xlu0 %v927, 8
  %v932 = vpop.permute.xlu0 %931
  %933 = vrot.lane.b32.xlu0 %v928, 8
  %v934 = vpop.permute.xlu0 %933
  %v937 = vsel %vm487, %v784, %v932
  %v938 = vsel %vm487, %v785, %v934
  %v939 = vld [vmem:[%s6] sm:$0xff]
  %v940 = vld [vmem:[%s6 + $0x8] sm:$0xff]
  %v941 = vld [vmem:[%s7] sm:$0x1]
  %v943 = vsel %vm218, %v937, 0
  %v946 = vsel %vm218, %v938, 0
  %948 = vmatprep.subr.mxu0 0.0
  %949 = vmatpush1.msra.mxu0 %v939
  %950 = vmatprep.subr.mxu0 0.0
  %951 = vmatpush1.msra.mxu0 %v940
  %952 = vmatprep.subr.mxu0 0.0
  %953 = vmatpush1.msra.mxu0 0.0
  %954 = vmatprep.subr.mxu0 0.0
  %955 = vmatpush1.msra.mxu0 0.0
  %956 = vmatprep.subr.mxu0 0.0
  %957 = vmatpush1.msra.mxu0 0.0
  %958 = vmatprep.subr.mxu0 0.0
  %959 = vmatpush1.msra.mxu0 0.0
  %960 = vmatprep.subr.mxu0 0.0
  %961 = vmatpush1.msra.mxu0 0.0
  %962 = vmatprep.subr.mxu0 0.0
  %963 = vmatpush1.msra.mxu0 0.0
  %964 = vmatprep.subr.mxu0 0.0
  %965 = vmatpush1.msra.mxu0 0.0
  %966 = vmatprep.subr.mxu0 0.0
  %967 = vmatpush1.msra.mxu0 0.0
  %968 = vmatprep.subr.mxu0 0.0
  %969 = vmatpush1.msra.mxu0 0.0
  %970 = vmatprep.subr.mxu0 0.0
  %971 = vmatpush1.msra.mxu0 0.0
  %972 = vmatprep.subr.mxu0 0.0
  %973 = vmatpush1.msra.mxu0 0.0
  %974 = vmatprep.subr.mxu0 0.0
  %975 = vmatpush1.msra.mxu0 0.0
  %976 = vmatprep.subr.mxu0 0.0
  %977 = vmatpush1.msra.mxu0 0.0
  %978 = vmatprep.subr.mxu0 0.0
  %979 = vmatpush1.msra.mxu0 0.0
  %980 = vmatprep.subr.mxu0 0.0
  %981 = vmatpush1.msra.mxu0 0.0
  %982 = vmatprep.subr.mxu0 0.0
  %983 = vmatpush1.msra.mxu0 0.0
  %984 = vmatprep.subr.mxu0 0.0
  %985 = vmatpush1.msra.mxu0 0.0
  %986 = vmatprep.subr.mxu0 0.0
  %987 = vmatpush1.msra.mxu0 0.0
  %988 = vmatprep.subr.mxu0 0.0
  %989 = vmatpush1.msra.mxu0 0.0
  %990 = vmatprep.subr.mxu0 0.0
  %991 = vmatpush1.msra.mxu0 0.0
  %992 = vmatprep.subr.mxu0 0.0
  %993 = vmatpush1.msra.mxu0 0.0
  %994 = vmatprep.subr.mxu0 0.0
  %995 = vmatpush1.msra.mxu0 0.0
  %996 = vmatprep.subr.mxu0 0.0
  %997 = vmatpush1.msra.mxu0 0.0
  %998 = vmatprep.subr.mxu0 0.0
  %999 = vmatpush1.msra.mxu0 0.0
  %1000 = vmatprep.subr.mxu0 0.0
  %1001 = vmatpush1.msra.mxu0 0.0
  %1002 = vmatprep.subr.mxu0 0.0
  %1003 = vmatpush1.msra.mxu0 0.0
  %1004 = vmatprep.subr.mxu0 0.0
  %1005 = vmatpush1.msra.mxu0 0.0
  %1006 = vmatprep.subr.mxu0 0.0
  %1007 = vmatpush1.msra.mxu0 0.0
  %1008 = vmatprep.subr.mxu0 0.0
  %1009 = vmatpush1.msra.mxu0 0.0
  %1010 = vmatprep.subr.mxu0 0.0
  %1011 = vmatpush1.msra.mxu0 0.0
  %1012 = vmatprep.mubr.f32.mxu0 0.0
  %1013 = vmatmul.mubr.f32.gmra.mrb[0].mxu0 %v943
  %v1014 = vpop.f32.mrb[0].mxu0
  %v1015 = vadd.f32 0.0, %v1014
  %v1016 = vpop.f32.mrb[0].mxu0
  %1017 = vmatprep.mubr.f32.mxu0 0.0
  %1018 = vmatmul.mubr.f32.gmra.mrb[0].mxu0 %v946
  %v1019 = vpop.f32.mrb[0].mxu0
  %v1020 = vadd.f32 0.0, %v1019
  %v1021 = vpop.f32.mrb[0].mxu0
  %1022 = vdwg.mxu0
  %v1024 = vsel %vm218, %v941, 0
  %1026 = vmatprep.subr.mxu0 0.0
  %1027 = vmatpush1.xpose.msra.mxu0 %v943
  %1028 = vmatprep.subr.mxu0 0.0
  %1029 = vmatpush1.xpose.msra.mxu0 %v946
  %1030 = vmatprep.subr.mxu0 0.0
  %1031 = vmatpush1.xpose.msra.mxu0 0.0
  %1032 = vmatprep.subr.mxu0 0.0
  %1033 = vmatpush1.xpose.msra.mxu0 0.0
  %1034 = vmatprep.subr.mxu0 0.0
  %1035 = vmatpush1.xpose.msra.mxu0 0.0
  %1036 = vmatprep.subr.mxu0 0.0
  %1037 = vmatpush1.xpose.msra.mxu0 0.0
  %1038 = vmatprep.subr.mxu0 0.0
  %1039 = vmatpush1.xpose.msra.mxu0 0.0
  %1040 = vmatprep.subr.mxu0 0.0
  %1041 = vmatpush1.xpose.msra.mxu0 0.0
  %1042 = vmatprep.subr.mxu0 0.0
  %1043 = vmatpush1.xpose.msra.mxu0 0.0
  %1044 = vmatprep.subr.mxu0 0.0
  %1045 = vmatpush1.xpose.msra.mxu0 0.0
  %1046 = vmatprep.subr.mxu0 0.0
  %1047 = vmatpush1.xpose.msra.mxu0 0.0
  %1048 = vmatprep.subr.mxu0 0.0
  %1049 = vmatpush1.xpose.msra.mxu0 0.0
  %1050 = vmatprep.subr.mxu0 0.0
  %1051 = vmatpush1.xpose.msra.mxu0 0.0
  %1052 = vmatprep.subr.mxu0 0.0
  %1053 = vmatpush1.xpose.msra.mxu0 0.0
  %1054 = vmatprep.subr.mxu0 0.0
  %1055 = vmatpush1.xpose.msra.mxu0 0.0
  %1056 = vmatprep.subr.mxu0 0.0
  %1057 = vmatpush1.xpose.msra.mxu0 0.0
  %1058 = vmatprep.subr.mxu0 0.0
  %1059 = vmatpush1.xpose.msra.mxu0 0.0
  %1060 = vmatprep.subr.mxu0 0.0
  %1061 = vmatpush1.xpose.msra.mxu0 0.0
  %1062 = vmatprep.subr.mxu0 0.0
  %1063 = vmatpush1.xpose.msra.mxu0 0.0
  %1064 = vmatprep.subr.mxu0 0.0
  %1065 = vmatpush1.xpose.msra.mxu0 0.0
  %1066 = vmatprep.subr.mxu0 0.0
  %1067 = vmatpush1.xpose.msra.mxu0 0.0
  %1068 = vmatprep.subr.mxu0 0.0
  %1069 = vmatpush1.xpose.msra.mxu0 0.0
  %1070 = vmatprep.subr.mxu0 0.0
  %1071 = vmatpush1.xpose.msra.mxu0 0.0
  %1072 = vmatprep.subr.mxu0 0.0
  %1073 = vmatpush1.xpose.msra.mxu0 0.0
  %1074 = vmatprep.subr.mxu0 0.0
  %1075 = vmatpush1.xpose.msra.mxu0 0.0
  %1076 = vmatprep.subr.mxu0 0.0
  %1077 = vmatpush1.xpose.msra.mxu0 0.0
  %1078 = vmatprep.subr.mxu0 0.0
  %1079 = vmatpush1.xpose.msra.mxu0 0.0
  %1080 = vmatprep.subr.mxu0 0.0
  %1081 = vmatpush1.xpose.msra.mxu0 0.0
  %1082 = vmatprep.subr.mxu0 0.0
  %1083 = vmatpush1.xpose.msra.mxu0 0.0
  %1084 = vmatprep.subr.mxu0 0.0
  %1085 = vmatpush1.xpose.msra.mxu0 0.0
  %1086 = vmatprep.subr.mxu0 0.0
  %1087 = vmatpush1.xpose.msra.mxu0 0.0
  %1088 = vmatprep.subr.mxu0 0.0
  %1089 = vmatpush1.xpose.msra.mxu0 0.0
  %1090 = vmatprep.mubr.f32.mxu0 0.0
  %1091 = vmatmul.mubr.f32.gmra.mrb[0].mxu0 %v1024
  %v1092 = vpop.f32.mrb[0].mxu0
  %v1093 = vadd.f32 0.0, %v1092
  %v1094 = vpop.f32.mrb[0].mxu0
  %1095 = vdwg.mxu0
  %1097 = vset.pattern.permute.xlu0 8
  %1098 = vperm.xlu0 %1097, %v1015
  %v1099 = vpop.permute.xlu0 %1098
  %1102 = vset.pattern.permute.xlu0 8
  %1103 = vperm.xlu0 %1102, %v1020
  %v1104 = vpop.permute.xlu0 %1103
  %v1106 = vlaneseq
  %v1107 = vshrl.u32 %v1106, 7
  %v1108 = vsub.s32 0, %v1107
  %v1109 = vrot.slane %v1093, %v1108
  %v1110 = vadd.f32 %v1099, %v1109
  %v1111 = vadd.f32 %v1104, %v1109
  %vm1112 = vcmp.gt.f32.partialorder %v1110, 0.0
  %vm1113 = vcmp.gt.f32.partialorder %v1111, 0.0
  %v1114 = vmul.f32 %v1110, 0.2
  %v1115 = vmul.f32 %v1111, 0.2
  %v1116 = vsel %vm1112, %v1110, %v1114
  %v1117 = vsel %vm1113, %v1111, %v1115
  %v1118 = vsel %vm218, %v1116, -inf
  %1119 = vmax.xlane.f32.xlu0 %v1118
  %v1120 = vpop.xlane.xlu0 %1119
  %v1121 = vsel %vm218, %v1117, -inf
  %1122 = vmax.xlane.f32.xlu0 %v1121
  %v1123 = vpop.xlane.xlu0 %1122
  %v1124 = vsub.f32 %v1116, %v1120
  %v1125 = vsub.f32 %v1117, %v1123
  %v1126 = vmul.f32 %v1124, 1.442695
  %v1127 = vpow.pop %v1126
  %v1128 = vmul.f32 %v1125, 1.442695
  %v1129 = vpow.pop %v1128
  %v1130 = vmul.f32 %v1127, %v32
  %v1131 = vmul.f32 %v1129, %v33
  %v1132 = vsel %vm218, %v1130, 0.0
  %1133 = vadd.xlane.f32.xlu0 %v1132
  %v1134 = vpop.xlane.xlu0 %1133
  %v1135 = vsel %vm218, %v1131, 0.0
  %1136 = vadd.xlane.f32.xlu0 %v1135
  %v1137 = vpop.xlane.xlu0 %1136
  %v1138 = vrcp.pop %v1134
  %v1139 = vmul.f32 %v1130, %v1138
  %v1140 = vrcp.pop %v1137
  %v1141 = vmul.f32 %v1131, %v1140
  %v1143 = vsel %vm218, %v1139, 0
  %v1146 = vsel %vm218, %v1141, 0
  %1148 = vmatprep.subr.mxu0 0.0
  %1149 = vmatpush1.msra.mxu0 %v1015
  %1150 = vmatprep.subr.mxu0 0.0
  %1151 = vmatpush1.msra.mxu0 %v1020
  %1152 = vmatprep.subr.mxu0 0.0
  %1153 = vmatpush1.msra.mxu0 0.0
  %1154 = vmatprep.subr.mxu0 0.0
  %1155 = vmatpush1.msra.mxu0 0.0
  %1156 = vmatprep.subr.mxu0 0.0
  %1157 = vmatpush1.msra.mxu0 0.0
  %1158 = vmatprep.subr.mxu0 0.0
  %1159 = vmatpush1.msra.mxu0 0.0
  %1160 = vmatprep.subr.mxu0 0.0
  %1161 = vmatpush1.msra.mxu0 0.0
  %1162 = vmatprep.subr.mxu0 0.0
  %1163 = vmatpush1.msra.mxu0 0.0
  %1164 = vmatprep.subr.mxu0 0.0
  %1165 = vmatpush1.msra.mxu0 0.0
  %1166 = vmatprep.subr.mxu0 0.0
  %1167 = vmatpush1.msra.mxu0 0.0
  %1168 = vmatprep.subr.mxu0 0.0
  %1169 = vmatpush1.msra.mxu0 0.0
  %1170 = vmatprep.subr.mxu0 0.0
  %1171 = vmatpush1.msra.mxu0 0.0
  %1172 = vmatprep.subr.mxu0 0.0
  %1173 = vmatpush1.msra.mxu0 0.0
  %1174 = vmatprep.subr.mxu0 0.0
  %1175 = vmatpush1.msra.mxu0 0.0
  %1176 = vmatprep.subr.mxu0 0.0
  %1177 = vmatpush1.msra.mxu0 0.0
  %1178 = vmatprep.subr.mxu0 0.0
  %1179 = vmatpush1.msra.mxu0 0.0
  %1180 = vmatprep.subr.mxu0 0.0
  %1181 = vmatpush1.msra.mxu0 0.0
  %1182 = vmatprep.subr.mxu0 0.0
  %1183 = vmatpush1.msra.mxu0 0.0
  %1184 = vmatprep.subr.mxu0 0.0
  %1185 = vmatpush1.msra.mxu0 0.0
  %1186 = vmatprep.subr.mxu0 0.0
  %1187 = vmatpush1.msra.mxu0 0.0
  %1188 = vmatprep.subr.mxu0 0.0
  %1189 = vmatpush1.msra.mxu0 0.0
  %1190 = vmatprep.subr.mxu0 0.0
  %1191 = vmatpush1.msra.mxu0 0.0
  %1192 = vmatprep.subr.mxu0 0.0
  %1193 = vmatpush1.msra.mxu0 0.0
  %1194 = vmatprep.subr.mxu0 0.0
  %1195 = vmatpush1.msra.mxu0 0.0
  %1196 = vmatprep.subr.mxu0 0.0
  %1197 = vmatpush1.msra.mxu0 0.0
  %1198 = vmatprep.subr.mxu0 0.0
  %1199 = vmatpush1.msra.mxu0 0.0
  %1200 = vmatprep.subr.mxu0 0.0
  %1201 = vmatpush1.msra.mxu0 0.0
  %1202 = vmatprep.subr.mxu0 0.0
  %1203 = vmatpush1.msra.mxu0 0.0
  %1204 = vmatprep.subr.mxu0 0.0
  %1205 = vmatpush1.msra.mxu0 0.0
  %1206 = vmatprep.subr.mxu0 0.0
  %1207 = vmatpush1.msra.mxu0 0.0
  %1208 = vmatprep.subr.mxu0 0.0
  %1209 = vmatpush1.msra.mxu0 0.0
  %1210 = vmatprep.subr.mxu0 0.0
  %1211 = vmatpush1.msra.mxu0 0.0
  %1212 = vmatprep.mubr.f32.mxu0 0.0
  %1213 = vmatmul.mubr.f32.gmra.mrb[0].mxu0 %v1143
  %v1214 = vpop.f32.mrb[0].mxu0
  %v1215 = vadd.f32 0.0, %v1214
  %v1216 = vpop.f32.mrb[0].mxu0
  %1217 = vmatprep.mubr.f32.mxu0 0.0
  %1218 = vmatmul.mubr.f32.gmra.mrb[0].mxu0 %v1146
  %v1219 = vpop.f32.mrb[0].mxu0
  %v1220 = vadd.f32 0.0, %v1219
  %v1221 = vpop.f32.mrb[0].mxu0
  %1222 = vdwg.mxu0
  %vm1223 = vcmp.gt.f32.partialorder %v1215, 0.0
  %vm1224 = vcmp.gt.f32.partialorder %v1220, 0.0
  %v1225 = vmin.f32 %v1215, 0.0
  %v1226 = vmin.f32 %v1220, 0.0
  %v1227 = vmul.f32 %v1225, 1.442695
  %v1228 = vpow.pop %v1227
  %v1229 = vmul.f32 %v1226, 1.442695
  %v1230 = vpow.pop %v1229
  %v1231 = vsub.f32 %v1228, 1.0
  %v1232 = vsub.f32 %v1230, 1.0
  %v1233 = vsel %vm1223, %v1215, %v1231
  %v1234 = vsel %vm1224, %v1220, %v1232
  %v1235 = vld [vmem:[%s8] sm:$0xff]
  %v1237 = vsel %vm487, %v1233, 0
  %v1240 = vsel %vm487, %v1234, 0
  %1242 = vmatprep.subr.mxu0 0.0
  %1243 = vmatpush1.msra.mxu0 %v1235
  %1244 = vmatprep.subr.mxu0 0.0
  %1245 = vmatpush1.msra.mxu0 0.0
  %1246 = vmatprep.subr.mxu0 0.0
  %1247 = vmatpush1.msra.mxu0 0.0
  %1248 = vmatprep.subr.mxu0 0.0
  %1249 = vmatpush1.msra.mxu0 0.0
  %1250 = vmatprep.subr.mxu0 0.0
  %1251 = vmatpush1.msra.mxu0 0.0
  %1252 = vmatprep.subr.mxu0 0.0
  %1253 = vmatpush1.msra.mxu0 0.0
  %1254 = vmatprep.subr.mxu0 0.0
  %1255 = vmatpush1.msra.mxu0 0.0
  %1256 = vmatprep.subr.mxu0 0.0
  %1257 = vmatpush1.msra.mxu0 0.0
  %1258 = vmatprep.subr.mxu0 0.0
  %1259 = vmatpush1.msra.mxu0 0.0
  %1260 = vmatprep.subr.mxu0 0.0
  %1261 = vmatpush1.msra.mxu0 0.0
  %1262 = vmatprep.subr.mxu0 0.0
  %1263 = vmatpush1.msra.mxu0 0.0
  %1264 = vmatprep.subr.mxu0 0.0
  %1265 = vmatpush1.msra.mxu0 0.0
  %1266 = vmatprep.subr.mxu0 0.0
  %1267 = vmatpush1.msra.mxu0 0.0
  %1268 = vmatprep.subr.mxu0 0.0
  %1269 = vmatpush1.msra.mxu0 0.0
  %1270 = vmatprep.subr.mxu0 0.0
  %1271 = vmatpush1.msra.mxu0 0.0
  %1272 = vmatprep.subr.mxu0 0.0
  %1273 = vmatpush1.msra.mxu0 0.0
  %1274 = vmatprep.subr.mxu0 0.0
  %1275 = vmatpush1.msra.mxu0 0.0
  %1276 = vmatprep.subr.mxu0 0.0
  %1277 = vmatpush1.msra.mxu0 0.0
  %1278 = vmatprep.subr.mxu0 0.0
  %1279 = vmatpush1.msra.mxu0 0.0
  %1280 = vmatprep.subr.mxu0 0.0
  %1281 = vmatpush1.msra.mxu0 0.0
  %1282 = vmatprep.subr.mxu0 0.0
  %1283 = vmatpush1.msra.mxu0 0.0
  %1284 = vmatprep.subr.mxu0 0.0
  %1285 = vmatpush1.msra.mxu0 0.0
  %1286 = vmatprep.subr.mxu0 0.0
  %1287 = vmatpush1.msra.mxu0 0.0
  %1288 = vmatprep.subr.mxu0 0.0
  %1289 = vmatpush1.msra.mxu0 0.0
  %1290 = vmatprep.subr.mxu0 0.0
  %1291 = vmatpush1.msra.mxu0 0.0
  %1292 = vmatprep.subr.mxu0 0.0
  %1293 = vmatpush1.msra.mxu0 0.0
  %1294 = vmatprep.subr.mxu0 0.0
  %1295 = vmatpush1.msra.mxu0 0.0
  %1296 = vmatprep.subr.mxu0 0.0
  %1297 = vmatpush1.msra.mxu0 0.0
  %1298 = vmatprep.subr.mxu0 0.0
  %1299 = vmatpush1.msra.mxu0 0.0
  %1300 = vmatprep.subr.mxu0 0.0
  %1301 = vmatpush1.msra.mxu0 0.0
  %1302 = vmatprep.subr.mxu0 0.0
  %1303 = vmatpush1.msra.mxu0 0.0
  %1304 = vmatprep.subr.mxu0 0.0
  %1305 = vmatpush1.msra.mxu0 0.0
  %1306 = vmatprep.mubr.f32.mxu0 0.0
  %1307 = vmatmul.mubr.f32.gmra.mrb[0].mxu0 %v1237
  %v1308 = vpop.f32.mrb[0].mxu0
  %v1309 = vadd.f32 0.0, %v1308
  %v1310 = vpop.f32.mrb[0].mxu0
  %1311 = vmatprep.mubr.f32.mxu0 0.0
  %1312 = vmatmul.mubr.f32.gmra.mrb[0].mxu0 %v1240
  %v1313 = vpop.f32.mrb[0].mxu0
  %v1314 = vadd.f32 0.0, %v1313
  %v1315 = vpop.f32.mrb[0].mxu0
  %1316 = vdwg.mxu0
  %vm1317 = vcmask 31744
  %1318 = vst.msk [vmem:[%s9] sm:$0xff] %vm1317, %v1309
  %1319 = vst.msk [vmem:[%s9 + $0x8] sm:$0xff] %vm1317, %v1314
  // Predicated region
  $region38: #{tpu_custom_call.1} parent=0 // pred_check
    _
  $region39: #{tpu_custom_call.1} parent=0 // pred_check_branch
    %1321 = sbr.rel (0) target = $region41
  $region40: #{tpu_custom_call.1} parent=0 // pred_region
    _
  $region41: #{tpu_custom_call.1} parent=0 // pred_fallthru
    _
  // Predicated region
  $region42: #{tpu_custom_call.1} parent=0 // pred_check
    _
  $region43: #{tpu_custom_call.1} parent=0 // pred_check_branch
    %1323 = sbr.rel (0) target = $region45
  $region44: #{tpu_custom_call.1} parent=0 // pred_region
    _
  $region45: #{tpu_custom_call.1} parent=0 // pred_fallthru
    _

</llo_original>
